<compile_context>
chip_gen: v7x
topology: tpu7x:2x2x1
jax: 0.10.0
libtpu: 0.0.40
codegen_flags: <defaults>
</compile_context>

<pallas_src>
import functools

import jax
import jax.numpy as jnp
from jax.experimental import pallas as pl
from jax.experimental.pallas import tpu as pltpu


def _round_up(x, m):
    return ((x + m - 1) // m) * m


# ----------------------------- kernel body ----------------------------------
def _rdb_kernel(x_ref, w_ref, b_ref, o_ref, col_ref, pad_ref, *, H, W):
    Cp, L = x_ref.shape              # channel-padded rows, lanes in this chunk
    HW = H * W
    SB = 9 * Cp                      # im2col rows per concatenated stage
    A = (pad_ref.shape[1] - L) // 2  # lane apron of the staging buffer (128-mult)

    # One-time hygiene: zero the staging-buffer aprons.  Every read that can
    # land in the apron is masked below, so this is not load-bearing.
    @pl.when(pl.program_id(0) == 0)
    def _():
        zeros_apron = jnp.zeros((Cp, A), jnp.float32)
        pad_ref[:, 0:A] = zeros_apron
        pad_ref[:, A + L:A + L + A] = zeros_apron

    # Hoisted per-tap validity masks (built once per grid step).  Row masks
    # (dh=+-1) also prevent +-W lane shifts from reading the adjacent image.
    lane = jax.lax.broadcasted_iota(jnp.int32, (Cp, L), 1)
    pix = lane % HW                  # pixel index within its image
    colw = lane % W                  # column index within its image row
    m_l = colw > 0                   # reading column w-1 is valid
    m_r = colw < (W - 1)             # reading column w+1 is valid
    m_u = pix >= W                   # reading row h-1 is valid
    m_d = pix < (HW - W)             # reading row h+1 is valid
    tap_mask = {
        (-1, -1): m_u & m_l, (-1, 0): m_u, (-1, 1): m_u & m_r,
        (0, -1): m_l,        (0, 0): None, (0, 1): m_r,
        (1, -1): m_d & m_l,  (1, 0): m_d,  (1, 1): m_d & m_r,
    }

    def append_taps(a, stage):
        """Write the 9 shifted (masked) copies of a (Cp, L) activation into
        this stage's block of col_ref (tap-major, 8-aligned row stride)."""
        base = stage * SB
        pad_ref[:, A:A + L] = a                     # aligned staging store
        for kh in range(3):
            for kw in range(3):
                dh, dw = kh - 1, kw - 1
                t = kh * 3 + kw
                if dh == 0 and dw == 0:
                    tap = a
                else:
                    s = dh * W + dw
                    tap = pad_ref[:, A + s:A + s + L]
                    tap = jnp.where(tap_mask[(dh, dw)], tap, 0.0)
                col_ref[base + t * Cp:base + (t + 1) * Cp, :] = tap

    def conv_stage(n_stages, w_off, b_col, relu):
        rows = n_stages * SB
        acc = jnp.dot(w_ref[:, w_off:w_off + rows], col_ref[0:rows, :],
                      preferred_element_type=jnp.float32)       # (Cp, L) MXU
        acc = acc + b_ref[:, b_col:b_col + 1]
        if relu:
            acc = jnp.maximum(acc, 0.0)
        return acc

    x_flat = x_ref[...].astype(jnp.float32)        # (Cp, L); pad rows are zero
    append_taps(x_flat, 0)
    out1 = conv_stage(1, 0 * SB, 0, True)
    append_taps(out1, 1)
    out2 = conv_stage(2, 1 * SB, 1, True)
    append_taps(out2, 2)
    out3 = conv_stage(3, 3 * SB, 2, True)
    append_taps(out3, 3)
    out4 = conv_stage(4, 6 * SB, 3, True)
    append_taps(out4, 4)
    out5 = conv_stage(5, 10 * SB, 4, False)
    # residual: out5 * 0.2 + x  (one full-width, lane-dense, unmasked store)
    o_ref[...] = (out5 * 0.2 + x_flat).astype(o_ref.dtype)


# ------------------------- host-side weight packing --------------------------
def _dense_weight_block(w, C):
    """conv1 (groups=1) weight (C, C, 3, 3) -> (C, 1, 9, C) [co, stage, tap, ci]."""
    return w.astype(jnp.float32).transpose(0, 2, 3, 1).reshape(C, 1, 9, C)


def _grouped_weight_block(w, C):
    """Grouped conv (groups=C) weight (C, k, 3, 3) -> dense (C, k, 9, C)
    [co, stage, tap, ci] over concat channels j = k*co + ci (PyTorch order)."""
    k = w.shape[1]
    Wd = jnp.zeros((C, k * C, 9), jnp.float32)
    co = jnp.arange(C)
    for ci in range(k):
        Wd = Wd.at[co, k * co + ci, :].set(
            w[:, ci, :, :].reshape(C, 9).astype(jnp.float32))
    # (co, j=s*C+c, t) -> (co, s, c, t) -> (co, s, t, c)
    return Wd.reshape(C, k, C, 9).transpose(0, 1, 3, 2)


def _pack_weight(Wblk, C, Cp):
    """(C, n_stages, 9, C) -> (Cp, n_stages*9*Cp) matching the 8-aligned
    im2col row layout [stage, tap, channel(Cp)]."""
    n_stages = Wblk.shape[1]
    Wp = jnp.pad(Wblk, ((0, Cp - C), (0, 0), (0, 0), (0, Cp - C)))
    return Wp.reshape(Cp, n_stages * 9 * Cp)


def _choose_batch_tile(N, HW, target_lanes=2048):
    """Largest divisor of N whose lane chunk stays <= target_lanes, while
    keeping at least 2 grid steps when N >= 2 (feeds both v7x TensorCores)."""
    cap = max(1, target_lanes // HW)
    best = 1
    for d in range(1, N + 1):
        if N % d == 0 and d <= cap and (N // d >= 2 or N == 1):
            best = d
    return best


# --------------------------------- wrapper -----------------------------------
def residual_dense_block(x, params):
    """x: (N, C, H, W); params: (w1, b1, ..., w5, b5) in PyTorch Conv2d layout
    (O, I/groups, kH, kW), matching ResidualDenseBlock_old.forward."""
    N, C, H, W = x.shape
    HW = H * W
    Cp = _round_up(C, 8)             # sublane-aligned channel rows
    SB = 9 * Cp                      # im2col rows per concatenated stage
    A_LANES = _round_up(W + 1, 128)  # staging-buffer apron (lane-aligned)
    B_TILE = _choose_batch_tile(N, HW)
    L_TILE = B_TILE * HW
    num_chunks = N // B_TILE

    w1, b1, w2, b2, w3, b3, w4, b4, w5, b5 = params

    # Lane-dense batched activation layout: (Cp, N*HW), images concatenated
    # along the lane axis, channels zero-padded to Cp sublanes.
    x_flat = jnp.transpose(x, (1, 0, 2, 3)).reshape(C, N * HW)
    x_flat = jnp.pad(x_flat, ((0, Cp - C), (0, 0))).astype(jnp.float32)

    # Matmul-ready weights: group structure folded in, channel axes padded to
    # Cp, all five matrices concatenated into one constant-index slab.
    Wms = [_pack_weight(_dense_weight_block(w1, C), C, Cp),
           _pack_weight(_grouped_weight_block(w2, C), C, Cp),
           _pack_weight(_grouped_weight_block(w3, C), C, Cp),
           _pack_weight(_grouped_weight_block(w4, C), C, Cp),
           _pack_weight(_grouped_weight_block(w5, C), C, Cp)]
    W_all = jnp.concatenate(Wms, axis=1)                              # (Cp, 15*SB)
    W_all = jnp.pad(W_all, ((0, 0),
                            (0, _round_up(W_all.shape[1], 128) - W_all.shape[1])))
    B_all = jnp.stack([jnp.pad(b.astype(jnp.float32), (0, Cp - C))
                       for b in (b1, b2, b3, b4, b5)], axis=1)        # (Cp, 5)
    B_all = jnp.pad(B_all, ((0, 0), (0, 128 - B_all.shape[1])))       # lane-pad

    grid_spec = pltpu.PrefetchScalarGridSpec(
        num_scalar_prefetch=0,
        grid=(num_chunks,),
        in_specs=[
            pl.BlockSpec((Cp, L_TILE), lambda g: (0, g)),    # x (lane-dense chunk)
            pl.BlockSpec(W_all.shape, lambda g: (0, 0)),     # weight slab (const)
            pl.BlockSpec(B_all.shape, lambda g: (0, 0)),     # bias slab (const)
        ],
        out_specs=pl.BlockSpec((Cp, L_TILE), lambda g: (0, g)),
        scratch_shapes=[
            pltpu.VMEM((5 * SB, L_TILE), jnp.float32),            # im2col slab
            pltpu.VMEM((Cp, L_TILE + 2 * A_LANES), jnp.float32),  # staging buf
        ],
    )

    kernel = functools.partial(_rdb_kernel, H=H, W=W)
    out = pl.pallas_call(
        kernel,
        out_shape=jax.ShapeDtypeStruct((Cp, N * HW), x.dtype),
        grid_spec=grid_spec,
        compiler_params=pltpu.CompilerParams(
            dimension_semantics=("parallel",)),
    )(x_flat, W_all, B_all)

    # Strip channel padding and restore (N, C, H, W).
    return jnp.transpose(out[:C].reshape(C, N, H, W), (1, 0, 2, 3))


# ---------------- pure-JAX reference (for correctness check) ----------------
def _conv2d_ref(x, w, b, groups):
    y = jax.lax.conv_general_dilated(
        x, w, window_strides=(1, 1), padding=((1, 1), (1, 1)),
        dimension_numbers=("NCHW", "OIHW", "NCHW"),
        feature_group_count=groups)
    return y + b[None, :, None, None]


def _rdb_ref(x, params):
    C = x.shape[1]
    w1, b1, w2, b2, w3, b3, w4, b4, w5, b5 = params
    out1 = jax.nn.relu(_conv2d_ref(x, w1, b1, 1))
    out2 = jax.nn.relu(_conv2d_ref(jnp.concatenate([x, out1], 1), w2, b2, C))
    out3 = jax.nn.relu(_conv2d_ref(jnp.concatenate([x, out1, out2], 1), w3, b3, C))
    out4 = jax.nn.relu(_conv2d_ref(jnp.concatenate([x, out1, out2, out3], 1), w4, b4, C))
    out5 = _conv2d_ref(jnp.concatenate([x, out1, out2, out3, out4], 1), w5, b5, C)
    return out5 * 0.2 + x


if __name__ == "__main__":
    N, C, H, W = 2, 4, 16, 16   # in_channels=4 (growth_rate unused by the module)

    key = jax.random.PRNGKey(0)
    ks = jax.random.split(key, 11)
    x = jax.random.normal(ks[0], (N, C, H, W), jnp.float32)

    # Deterministic synthetic parameters (PyTorch Conv2d layout: O, I/groups, kH, kW).
    def wb(kw_key, kb_key, out_c, in_per_group):
        w = 0.1 * jax.random.normal(kw_key, (out_c, in_per_group, 3, 3), jnp.float32)
        b = 0.1 * jax.random.normal(kb_key, (out_c,), jnp.float32)
        return w, b

    w1, b1 = wb(ks[1], ks[2], C, C)    # conv1: dense, groups=1
    w2, b2 = wb(ks[3], ks[4], C, 2)    # conv2: groups=C, 2 in-ch per group
    w3, b3 = wb(ks[5], ks[6], C, 3)    # conv3: groups=C, 3 in-ch per group
    w4, b4 = wb(ks[7], ks[8], C, 4)    # conv4: groups=C, 4 in-ch per group
    w5, b5 = wb(ks[9], ks[10], C, 5)   # conv5: groups=C, 5 in-ch per group
    params = (w1, b1, w2, b2, w3, b3, w4, b4, w5, b5)

    out = jax.block_until_ready(residual_dense_block(x, params))
    ref = jax.block_until_ready(_rdb_ref(x, params))

    assert out.shape == ref.shape and out.dtype == ref.dtype
    max_err = float(jnp.max(jnp.abs(out - ref)))
    assert jnp.allclose(out, ref, rtol=1e-3, atol=1e-3), f"max abs err {max_err}"

    print("KERNEL_OK")
</pallas_src>

<mosaic_0001>
module attributes {stable_mosaic.version = 11 : i64} {
  func.func @_rdb_kernel(%arg0: i32, %arg1: memref<8x256xf32, #tpu.memory_space<vmem>>, %arg2: memref<8x1152xf32, #tpu.memory_space<vmem>>, %arg3: memref<8x128xf32, #tpu.memory_space<vmem>>, %arg4: memref<8x256xf32, #tpu.memory_space<vmem>>, %arg5: memref<360x256xf32, #tpu.memory_space<vmem>>, %arg6: memref<8x512xf32, #tpu.memory_space<vmem>>) attributes {dimension_semantics = [#tpu.dimension_semantics<parallel>], iteration_bounds = array<i64: 2>, scalar_prefetch = 0 : i64, scratch_operands = 2 : i64, tpu.core_type = #tpu.core_type<tc>, window_params = [{transform_indices = @transform_0, window_bounds = array<i64: 8, 256>}, {pipeline_mode = #tpu.pipeline_mode<synchronous>, transform_indices = @transform_1, window_bounds = array<i64: 8, 1152>}, {pipeline_mode = #tpu.pipeline_mode<synchronous>, transform_indices = @transform_2, window_bounds = array<i64: 8, 128>}, {transform_indices = @transform_3, window_bounds = array<i64: 8, 256>}]} {
    %c0_i32 = arith.constant 0 : i32
    %0 = arith.cmpi eq, %arg0, %c0_i32 : i32
    %1 = arith.extui %0 : i1 to i32
    %c0_i32_0 = arith.constant 0 : i32
    %2 = arith.cmpi ne, %1, %c0_i32_0 : i32
    scf.if %2 {
      %cst_218 = arith.constant 0.000000e+00 : f32
      %261 = vector.broadcast %cst_218 : f32 to vector<8x128xf32>
      %c0_219 = arith.constant 0 : index
      %c0_220 = arith.constant 0 : index
      %262 = vector.load %arg6[%c0_219, %c0_220] : memref<8x512xf32, #tpu.memory_space<vmem>>, vector<8x128xf32>
      tpu.vector_store %arg6[%c0_219, %c0_220], %261 {strides = array<i32>} : memref<8x512xf32, #tpu.memory_space<vmem>>, vector<8x128xf32>,
      %c0_221 = arith.constant 0 : index
      %c384 = arith.constant 384 : index
      %263 = vector.load %arg6[%c0_221, %c384] : memref<8x512xf32, #tpu.memory_space<vmem>>, vector<8x128xf32>
      tpu.vector_store %arg6[%c0_221, %c384], %261 {strides = array<i32>} : memref<8x512xf32, #tpu.memory_space<vmem>>, vector<8x128xf32>,
    } else {
    }
    %3 = tpu.iota {dimensions = array<i32: 1>} : vector<8x256xi32>
    %c256_i32 = arith.constant 256 : i32
    %c0_i32_1 = arith.constant 0 : i32
    %4 = arith.cmpi eq, %c256_i32, %c0_i32_1 : i32
    %c1_i32 = arith.constant 1 : i32
    %5 = arith.select %4, %c1_i32, %c256_i32 : i32
    %6 = vector.broadcast %5 : i32 to vector<8x256xi32>
    %7 = arith.remsi %3, %6 : vector<8x256xi32>
    %c0_i32_2 = arith.constant 0 : i32
    %8 = vector.broadcast %c0_i32_2 : i32 to vector<8x256xi32>
    %9 = arith.cmpi ne, %7, %8 : vector<8x256xi32>
    %c0_i32_3 = arith.constant 0 : i32
    %10 = vector.broadcast %c0_i32_3 : i32 to vector<8x256xi32>
    %11 = arith.cmpi slt, %7, %10 : vector<8x256xi32>
    %c0_i32_4 = arith.constant 0 : i32
    %12 = arith.cmpi slt, %5, %c0_i32_4 : i32
    %13 = vector.broadcast %12 : i1 to vector<8x256xi1>
    %14 = vector.broadcast %13 : vector<8x256xi1> to vector<8x256xi1>
    %15 = arith.xori %11, %14 : vector<8x256xi1>
    %16 = arith.andi %15, %9 : vector<8x256xi1>
    %17 = vector.broadcast %5 : i32 to vector<8x256xi32>
    %18 = arith.addi %7, %17 : vector<8x256xi32>
    %19 = arith.select %16, %18, %7 : vector<8x256xi1>, vector<8x256xi32>
    %c16_i32 = arith.constant 16 : i32
    %c0_i32_5 = arith.constant 0 : i32
    %20 = arith.cmpi eq, %c16_i32, %c0_i32_5 : i32
    %c1_i32_6 = arith.constant 1 : i32
    %21 = arith.select %20, %c1_i32_6, %c16_i32 : i32
    %22 = vector.broadcast %21 : i32 to vector<8x256xi32>
    %23 = arith.remsi %3, %22 : vector<8x256xi32>
    %c0_i32_7 = arith.constant 0 : i32
    %24 = vector.broadcast %c0_i32_7 : i32 to vector<8x256xi32>
    %25 = arith.cmpi ne, %23, %24 : vector<8x256xi32>
    %c0_i32_8 = arith.constant 0 : i32
    %26 = vector.broadcast %c0_i32_8 : i32 to vector<8x256xi32>
    %27 = arith.cmpi slt, %23, %26 : vector<8x256xi32>
    %c0_i32_9 = arith.constant 0 : i32
    %28 = arith.cmpi slt, %21, %c0_i32_9 : i32
    %29 = vector.broadcast %28 : i1 to vector<8x256xi1>
    %30 = vector.broadcast %29 : vector<8x256xi1> to vector<8x256xi1>
    %31 = arith.xori %27, %30 : vector<8x256xi1>
    %32 = arith.andi %31, %25 : vector<8x256xi1>
    %33 = vector.broadcast %21 : i32 to vector<8x256xi32>
    %34 = arith.addi %23, %33 : vector<8x256xi32>
    %35 = arith.select %32, %34, %23 : vector<8x256xi1>, vector<8x256xi32>
    %c0_i32_10 = arith.constant 0 : i32
    %36 = vector.broadcast %c0_i32_10 : i32 to vector<8x256xi32>
    %37 = arith.cmpi sgt, %35, %36 : vector<8x256xi32>
    %c15_i32 = arith.constant 15 : i32
    %38 = vector.broadcast %c15_i32 : i32 to vector<8x256xi32>
    %39 = arith.cmpi slt, %35, %38 : vector<8x256xi32>
    %c16_i32_11 = arith.constant 16 : i32
    %40 = vector.broadcast %c16_i32_11 : i32 to vector<8x256xi32>
    %41 = arith.cmpi sge, %19, %40 : vector<8x256xi32>
    %c240_i32 = arith.constant 240 : i32
    %42 = vector.broadcast %c240_i32 : i32 to vector<8x256xi32>
    %43 = arith.cmpi slt, %19, %42 : vector<8x256xi32>
    %44 = arith.andi %41, %37 : vector<8x256xi1>
    %45 = arith.andi %41, %39 : vector<8x256xi1>
    %46 = arith.andi %43, %37 : vector<8x256xi1>
    %47 = arith.andi %43, %39 : vector<8x256xi1>
    %c0 = arith.constant 0 : index
    %c0_12 = arith.constant 0 : index
    %48 = vector.load %arg1[%c0, %c0_12] : memref<8x256xf32, #tpu.memory_space<vmem>>, vector<8x256xf32>
    %c0_13 = arith.constant 0 : index
    %c128 = arith.constant 128 : index
    %49 = vector.load %arg6[%c0_13, %c128] : memref<8x512xf32, #tpu.memory_space<vmem>>, vector<8x256xf32>
    tpu.vector_store %arg6[%c0_13, %c128], %48 {strides = array<i32>} : memref<8x512xf32, #tpu.memory_space<vmem>>, vector<8x256xf32>,
    %c0_14 = arith.constant 0 : index
    %c111 = arith.constant 111 : index
    %50 = vector.load %arg6[%c0_14, %c111] : memref<8x512xf32, #tpu.memory_space<vmem>>, vector<8x256xf32>
    %cst = arith.constant 0.000000e+00 : f32
    %51 = vector.broadcast %cst : f32 to vector<8x256xf32>
    %52 = arith.select %44, %50, %51 : vector<8x256xi1>, vector<8x256xf32>
    %c0_15 = arith.constant 0 : index
    %c0_16 = arith.constant 0 : index
    %53 = vector.load %arg5[%c0_15, %c0_16] : memref<360x256xf32, #tpu.memory_space<vmem>>, vector<8x256xf32>
    tpu.vector_store %arg5[%c0_15, %c0_16], %52 {strides = array<i32>} : memref<360x256xf32, #tpu.memory_space<vmem>>, vector<8x256xf32>,
    %c0_17 = arith.constant 0 : index
    %c112 = arith.constant 112 : index
    %54 = vector.load %arg6[%c0_17, %c112] : memref<8x512xf32, #tpu.memory_space<vmem>>, vector<8x256xf32>
    %cst_18 = arith.constant 0.000000e+00 : f32
    %55 = vector.broadcast %cst_18 : f32 to vector<8x256xf32>
    %56 = arith.select %41, %54, %55 : vector<8x256xi1>, vector<8x256xf32>
    %c8 = arith.constant 8 : index
    %c0_19 = arith.constant 0 : index
    %57 = vector.load %arg5[%c8, %c0_19] : memref<360x256xf32, #tpu.memory_space<vmem>>, vector<8x256xf32>
    tpu.vector_store %arg5[%c8, %c0_19], %56 {strides = array<i32>} : memref<360x256xf32, #tpu.memory_space<vmem>>, vector<8x256xf32>,
    %c0_20 = arith.constant 0 : index
    %c113 = arith.constant 113 : index
    %58 = vector.load %arg6[%c0_20, %c113] : memref<8x512xf32, #tpu.memory_space<vmem>>, vector<8x256xf32>
    %cst_21 = arith.constant 0.000000e+00 : f32
    %59 = vector.broadcast %cst_21 : f32 to vector<8x256xf32>
    %60 = arith.select %45, %58, %59 : vector<8x256xi1>, vector<8x256xf32>
    %c16 = arith.constant 16 : index
    %c0_22 = arith.constant 0 : index
    %61 = vector.load %arg5[%c16, %c0_22] : memref<360x256xf32, #tpu.memory_space<vmem>>, vector<8x256xf32>
    tpu.vector_store %arg5[%c16, %c0_22], %60 {strides = array<i32>} : memref<360x256xf32, #tpu.memory_space<vmem>>, vector<8x256xf32>,
    %c0_23 = arith.constant 0 : index
    %c127 = arith.constant 127 : index
    %62 = vector.load %arg6[%c0_23, %c127] : memref<8x512xf32, #tpu.memory_space<vmem>>, vector<8x256xf32>
    %cst_24 = arith.constant 0.000000e+00 : f32
    %63 = vector.broadcast %cst_24 : f32 to vector<8x256xf32>
    %64 = arith.select %37, %62, %63 : vector<8x256xi1>, vector<8x256xf32>
    %c24 = arith.constant 24 : index
    %c0_25 = arith.constant 0 : index
    %65 = vector.load %arg5[%c24, %c0_25] : memref<360x256xf32, #tpu.memory_space<vmem>>, vector<8x256xf32>
    tpu.vector_store %arg5[%c24, %c0_25], %64 {strides = array<i32>} : memref<360x256xf32, #tpu.memory_space<vmem>>, vector<8x256xf32>,
    %c32 = arith.constant 32 : index
    %c0_26 = arith.constant 0 : index
    %66 = vector.load %arg5[%c32, %c0_26] : memref<360x256xf32, #tpu.memory_space<vmem>>, vector<8x256xf32>
    tpu.vector_store %arg5[%c32, %c0_26], %48 {strides = array<i32>} : memref<360x256xf32, #tpu.memory_space<vmem>>, vector<8x256xf32>,
    %c0_27 = arith.constant 0 : index
    %c129 = arith.constant 129 : index
    %67 = vector.load %arg6[%c0_27, %c129] : memref<8x512xf32, #tpu.memory_space<vmem>>, vector<8x256xf32>
    %cst_28 = arith.constant 0.000000e+00 : f32
    %68 = vector.broadcast %cst_28 : f32 to vector<8x256xf32>
    %69 = arith.select %39, %67, %68 : vector<8x256xi1>, vector<8x256xf32>
    %c40 = arith.constant 40 : index
    %c0_29 = arith.constant 0 : index
    %70 = vector.load %arg5[%c40, %c0_29] : memref<360x256xf32, #tpu.memory_space<vmem>>, vector<8x256xf32>
    tpu.vector_store %arg5[%c40, %c0_29], %69 {strides = array<i32>} : memref<360x256xf32, #tpu.memory_space<vmem>>, vector<8x256xf32>,
    %c0_30 = arith.constant 0 : index
    %c143 = arith.constant 143 : index
    %71 = vector.load %arg6[%c0_30, %c143] : memref<8x512xf32, #tpu.memory_space<vmem>>, vector<8x256xf32>
    %cst_31 = arith.constant 0.000000e+00 : f32
    %72 = vector.broadcast %cst_31 : f32 to vector<8x256xf32>
    %73 = arith.select %46, %71, %72 : vector<8x256xi1>, vector<8x256xf32>
    %c48 = arith.constant 48 : index
    %c0_32 = arith.constant 0 : index
    %74 = vector.load %arg5[%c48, %c0_32] : memref<360x256xf32, #tpu.memory_space<vmem>>, vector<8x256xf32>
    tpu.vector_store %arg5[%c48, %c0_32], %73 {strides = array<i32>} : memref<360x256xf32, #tpu.memory_space<vmem>>, vector<8x256xf32>,
    %c0_33 = arith.constant 0 : index
    %c144 = arith.constant 144 : index
    %75 = vector.load %arg6[%c0_33, %c144] : memref<8x512xf32, #tpu.memory_space<vmem>>, vector<8x256xf32>
    %cst_34 = arith.constant 0.000000e+00 : f32
    %76 = vector.broadcast %cst_34 : f32 to vector<8x256xf32>
    %77 = arith.select %43, %75, %76 : vector<8x256xi1>, vector<8x256xf32>
    %c56 = arith.constant 56 : index
    %c0_35 = arith.constant 0 : index
    %78 = vector.load %arg5[%c56, %c0_35] : memref<360x256xf32, #tpu.memory_space<vmem>>, vector<8x256xf32>
    tpu.vector_store %arg5[%c56, %c0_35], %77 {strides = array<i32>} : memref<360x256xf32, #tpu.memory_space<vmem>>, vector<8x256xf32>,
    %c0_36 = arith.constant 0 : index
    %c145 = arith.constant 145 : index
    %79 = vector.load %arg6[%c0_36, %c145] : memref<8x512xf32, #tpu.memory_space<vmem>>, vector<8x256xf32>
    %cst_37 = arith.constant 0.000000e+00 : f32
    %80 = vector.broadcast %cst_37 : f32 to vector<8x256xf32>
    %81 = arith.select %47, %79, %80 : vector<8x256xi1>, vector<8x256xf32>
    %c64 = arith.constant 64 : index
    %c0_38 = arith.constant 0 : index
    %82 = vector.load %arg5[%c64, %c0_38] : memref<360x256xf32, #tpu.memory_space<vmem>>, vector<8x256xf32>
    tpu.vector_store %arg5[%c64, %c0_38], %81 {strides = array<i32>} : memref<360x256xf32, #tpu.memory_space<vmem>>, vector<8x256xf32>,
    %c0_39 = arith.constant 0 : index
    %c0_40 = arith.constant 0 : index
    %83 = vector.load %arg2[%c0_39, %c0_40] : memref<8x1152xf32, #tpu.memory_space<vmem>>, vector<8x72xf32>
    %c0_41 = arith.constant 0 : index
    %c0_42 = arith.constant 0 : index
    %84 = vector.load %arg5[%c0_41, %c0_42] : memref<360x256xf32, #tpu.memory_space<vmem>>, vector<72x256xf32>
    %cst_43 = arith.constant dense<0.000000e+00> : vector<8x256xf32>
    %85 = tpu.matmul %83, %84, %cst_43 {dimension_numbers = #tpu.dot_dimension_numbers<[1], [0], [0], [1], [0, 0, 1, 1], [], []>} : vector<8x72xf32>, vector<72x256xf32>, vector<8x256xf32> -> vector<8x256xf32>
    %c0_44 = arith.constant 0 : index
    %c0_45 = arith.constant 0 : index
    %86 = vector.load %arg3[%c0_44, %c0_45] : memref<8x128xf32, #tpu.memory_space<vmem>>, vector<8x1xf32>
    %87 = vector.broadcast %86 : vector<8x1xf32> to vector<8x256xf32>
    %88 = arith.addf %85, %87 : vector<8x256xf32>
    %cst_46 = arith.constant 0.000000e+00 : f32
    %89 = vector.broadcast %cst_46 : f32 to vector<8x256xf32>
    %90 = arith.maximumf %88, %89 : vector<8x256xf32>
    %c0_47 = arith.constant 0 : index
    %c128_48 = arith.constant 128 : index
    %91 = vector.load %arg6[%c0_47, %c128_48] : memref<8x512xf32, #tpu.memory_space<vmem>>, vector<8x256xf32>
    tpu.vector_store %arg6[%c0_47, %c128_48], %90 {strides = array<i32>} : memref<8x512xf32, #tpu.memory_space<vmem>>, vector<8x256xf32>,
    %c0_49 = arith.constant 0 : index
    %c111_50 = arith.constant 111 : index
    %92 = vector.load %arg6[%c0_49, %c111_50] : memref<8x512xf32, #tpu.memory_space<vmem>>, vector<8x256xf32>
    %cst_51 = arith.constant 0.000000e+00 : f32
    %93 = vector.broadcast %cst_51 : f32 to vector<8x256xf32>
    %94 = arith.select %44, %92, %93 : vector<8x256xi1>, vector<8x256xf32>
    %c72 = arith.constant 72 : index
    %c0_52 = arith.constant 0 : index
    %95 = vector.load %arg5[%c72, %c0_52] : memref<360x256xf32, #tpu.memory_space<vmem>>, vector<8x256xf32>
    tpu.vector_store %arg5[%c72, %c0_52], %94 {strides = array<i32>} : memref<360x256xf32, #tpu.memory_space<vmem>>, vector<8x256xf32>,
    %c0_53 = arith.constant 0 : index
    %c112_54 = arith.constant 112 : index
    %96 = vector.load %arg6[%c0_53, %c112_54] : memref<8x512xf32, #tpu.memory_space<vmem>>, vector<8x256xf32>
    %cst_55 = arith.constant 0.000000e+00 : f32
    %97 = vector.broadcast %cst_55 : f32 to vector<8x256xf32>
    %98 = arith.select %41, %96, %97 : vector<8x256xi1>, vector<8x256xf32>
    %c80 = arith.constant 80 : index
    %c0_56 = arith.constant 0 : index
    %99 = vector.load %arg5[%c80, %c0_56] : memref<360x256xf32, #tpu.memory_space<vmem>>, vector<8x256xf32>
    tpu.vector_store %arg5[%c80, %c0_56], %98 {strides = array<i32>} : memref<360x256xf32, #tpu.memory_space<vmem>>, vector<8x256xf32>,
    %c0_57 = arith.constant 0 : index
    %c113_58 = arith.constant 113 : index
    %100 = vector.load %arg6[%c0_57, %c113_58] : memref<8x512xf32, #tpu.memory_space<vmem>>, vector<8x256xf32>
    %cst_59 = arith.constant 0.000000e+00 : f32
    %101 = vector.broadcast %cst_59 : f32 to vector<8x256xf32>
    %102 = arith.select %45, %100, %101 : vector<8x256xi1>, vector<8x256xf32>
    %c88 = arith.constant 88 : index
    %c0_60 = arith.constant 0 : index
    %103 = vector.load %arg5[%c88, %c0_60] : memref<360x256xf32, #tpu.memory_space<vmem>>, vector<8x256xf32>
    tpu.vector_store %arg5[%c88, %c0_60], %102 {strides = array<i32>} : memref<360x256xf32, #tpu.memory_space<vmem>>, vector<8x256xf32>,
    %c0_61 = arith.constant 0 : index
    %c127_62 = arith.constant 127 : index
    %104 = vector.load %arg6[%c0_61, %c127_62] : memref<8x512xf32, #tpu.memory_space<vmem>>, vector<8x256xf32>
    %cst_63 = arith.constant 0.000000e+00 : f32
    %105 = vector.broadcast %cst_63 : f32 to vector<8x256xf32>
    %106 = arith.select %37, %104, %105 : vector<8x256xi1>, vector<8x256xf32>
    %c96 = arith.constant 96 : index
    %c0_64 = arith.constant 0 : index
    %107 = vector.load %arg5[%c96, %c0_64] : memref<360x256xf32, #tpu.memory_space<vmem>>, vector<8x256xf32>
    tpu.vector_store %arg5[%c96, %c0_64], %106 {strides = array<i32>} : memref<360x256xf32, #tpu.memory_space<vmem>>, vector<8x256xf32>,
    %c104 = arith.constant 104 : index
    %c0_65 = arith.constant 0 : index
    %108 = vector.load %arg5[%c104, %c0_65] : memref<360x256xf32, #tpu.memory_space<vmem>>, vector<8x256xf32>
    tpu.vector_store %arg5[%c104, %c0_65], %90 {strides = array<i32>} : memref<360x256xf32, #tpu.memory_space<vmem>>, vector<8x256xf32>,
    %c0_66 = arith.constant 0 : index
    %c129_67 = arith.constant 129 : index
    %109 = vector.load %arg6[%c0_66, %c129_67] : memref<8x512xf32, #tpu.memory_space<vmem>>, vector<8x256xf32>
    %cst_68 = arith.constant 0.000000e+00 : f32
    %110 = vector.broadcast %cst_68 : f32 to vector<8x256xf32>
    %111 = arith.select %39, %109, %110 : vector<8x256xi1>, vector<8x256xf32>
    %c112_69 = arith.constant 112 : index
    %c0_70 = arith.constant 0 : index
    %112 = vector.load %arg5[%c112_69, %c0_70] : memref<360x256xf32, #tpu.memory_space<vmem>>, vector<8x256xf32>
    tpu.vector_store %arg5[%c112_69, %c0_70], %111 {strides = array<i32>} : memref<360x256xf32, #tpu.memory_space<vmem>>, vector<8x256xf32>,
    %c0_71 = arith.constant 0 : index
    %c143_72 = arith.constant 143 : index
    %113 = vector.load %arg6[%c0_71, %c143_72] : memref<8x512xf32, #tpu.memory_space<vmem>>, vector<8x256xf32>
    %cst_73 = arith.constant 0.000000e+00 : f32
    %114 = vector.broadcast %cst_73 : f32 to vector<8x256xf32>
    %115 = arith.select %46, %113, %114 : vector<8x256xi1>, vector<8x256xf32>
    %c120 = arith.constant 120 : index
    %c0_74 = arith.constant 0 : index
    %116 = vector.load %arg5[%c120, %c0_74] : memref<360x256xf32, #tpu.memory_space<vmem>>, vector<8x256xf32>
    tpu.vector_store %arg5[%c120, %c0_74], %115 {strides = array<i32>} : memref<360x256xf32, #tpu.memory_space<vmem>>, vector<8x256xf32>,
    %c0_75 = arith.constant 0 : index
    %c144_76 = arith.constant 144 : index
    %117 = vector.load %arg6[%c0_75, %c144_76] : memref<8x512xf32, #tpu.memory_space<vmem>>, vector<8x256xf32>
    %cst_77 = arith.constant 0.000000e+00 : f32
    %118 = vector.broadcast %cst_77 : f32 to vector<8x256xf32>
    %119 = arith.select %43, %117, %118 : vector<8x256xi1>, vector<8x256xf32>
    %c128_78 = arith.constant 128 : index
    %c0_79 = arith.constant 0 : index
    %120 = vector.load %arg5[%c128_78, %c0_79] : memref<360x256xf32, #tpu.memory_space<vmem>>, vector<8x256xf32>
    tpu.vector_store %arg5[%c128_78, %c0_79], %119 {strides = array<i32>} : memref<360x256xf32, #tpu.memory_space<vmem>>, vector<8x256xf32>,
    %c0_80 = arith.constant 0 : index
    %c145_81 = arith.constant 145 : index
    %121 = vector.load %arg6[%c0_80, %c145_81] : memref<8x512xf32, #tpu.memory_space<vmem>>, vector<8x256xf32>
    %cst_82 = arith.constant 0.000000e+00 : f32
    %122 = vector.broadcast %cst_82 : f32 to vector<8x256xf32>
    %123 = arith.select %47, %121, %122 : vector<8x256xi1>, vector<8x256xf32>
    %c136 = arith.constant 136 : index
    %c0_83 = arith.constant 0 : index
    %124 = vector.load %arg5[%c136, %c0_83] : memref<360x256xf32, #tpu.memory_space<vmem>>, vector<8x256xf32>
    tpu.vector_store %arg5[%c136, %c0_83], %123 {strides = array<i32>} : memref<360x256xf32, #tpu.memory_space<vmem>>, vector<8x256xf32>,
    %c0_84 = arith.constant 0 : index
    %c72_85 = arith.constant 72 : index
    %125 = vector.load %arg2[%c0_84, %c72_85] : memref<8x1152xf32, #tpu.memory_space<vmem>>, vector<8x144xf32>
    %c0_86 = arith.constant 0 : index
    %c0_87 = arith.constant 0 : index
    %126 = vector.load %arg5[%c0_86, %c0_87] : memref<360x256xf32, #tpu.memory_space<vmem>>, vector<144x256xf32>
    %cst_88 = arith.constant dense<0.000000e+00> : vector<8x256xf32>
    %127 = tpu.matmul %125, %126, %cst_88 {dimension_numbers = #tpu.dot_dimension_numbers<[1], [0], [0], [1], [0, 0, 1, 1], [], []>} : vector<8x144xf32>, vector<144x256xf32>, vector<8x256xf32> -> vector<8x256xf32>
    %c0_89 = arith.constant 0 : index
    %c1 = arith.constant 1 : index
    %128 = vector.load %arg3[%c0_89, %c1] : memref<8x128xf32, #tpu.memory_space<vmem>>, vector<8x1xf32>
    %129 = vector.broadcast %128 : vector<8x1xf32> to vector<8x256xf32>
    %130 = arith.addf %127, %129 : vector<8x256xf32>
    %cst_90 = arith.constant 0.000000e+00 : f32
    %131 = vector.broadcast %cst_90 : f32 to vector<8x256xf32>
    %132 = arith.maximumf %130, %131 : vector<8x256xf32>
    %c0_91 = arith.constant 0 : index
    %c128_92 = arith.constant 128 : index
    %133 = vector.load %arg6[%c0_91, %c128_92] : memref<8x512xf32, #tpu.memory_space<vmem>>, vector<8x256xf32>
    tpu.vector_store %arg6[%c0_91, %c128_92], %132 {strides = array<i32>} : memref<8x512xf32, #tpu.memory_space<vmem>>, vector<8x256xf32>,
    %c0_93 = arith.constant 0 : index
    %c111_94 = arith.constant 111 : index
    %134 = vector.load %arg6[%c0_93, %c111_94] : memref<8x512xf32, #tpu.memory_space<vmem>>, vector<8x256xf32>
    %cst_95 = arith.constant 0.000000e+00 : f32
    %135 = vector.broadcast %cst_95 : f32 to vector<8x256xf32>
    %136 = arith.select %44, %134, %135 : vector<8x256xi1>, vector<8x256xf32>
    %c144_96 = arith.constant 144 : index
    %c0_97 = arith.constant 0 : index
    %137 = vector.load %arg5[%c144_96, %c0_97] : memref<360x256xf32, #tpu.memory_space<vmem>>, vector<8x256xf32>
    tpu.vector_store %arg5[%c144_96, %c0_97], %136 {strides = array<i32>} : memref<360x256xf32, #tpu.memory_space<vmem>>, vector<8x256xf32>,
    %c0_98 = arith.constant 0 : index
    %c112_99 = arith.constant 112 : index
    %138 = vector.load %arg6[%c0_98, %c112_99] : memref<8x512xf32, #tpu.memory_space<vmem>>, vector<8x256xf32>
    %cst_100 = arith.constant 0.000000e+00 : f32
    %139 = vector.broadcast %cst_100 : f32 to vector<8x256xf32>
    %140 = arith.select %41, %138, %139 : vector<8x256xi1>, vector<8x256xf32>
    %c152 = arith.constant 152 : index
    %c0_101 = arith.constant 0 : index
    %141 = vector.load %arg5[%c152, %c0_101] : memref<360x256xf32, #tpu.memory_space<vmem>>, vector<8x256xf32>
    tpu.vector_store %arg5[%c152, %c0_101], %140 {strides = array<i32>} : memref<360x256xf32, #tpu.memory_space<vmem>>, vector<8x256xf32>,
    %c0_102 = arith.constant 0 : index
    %c113_103 = arith.constant 113 : index
    %142 = vector.load %arg6[%c0_102, %c113_103] : memref<8x512xf32, #tpu.memory_space<vmem>>, vector<8x256xf32>
    %cst_104 = arith.constant 0.000000e+00 : f32
    %143 = vector.broadcast %cst_104 : f32 to vector<8x256xf32>
    %144 = arith.select %45, %142, %143 : vector<8x256xi1>, vector<8x256xf32>
    %c160 = arith.constant 160 : index
    %c0_105 = arith.constant 0 : index
    %145 = vector.load %arg5[%c160, %c0_105] : memref<360x256xf32, #tpu.memory_space<vmem>>, vector<8x256xf32>
    tpu.vector_store %arg5[%c160, %c0_105], %144 {strides = array<i32>} : memref<360x256xf32, #tpu.memory_space<vmem>>, vector<8x256xf32>,
    %c0_106 = arith.constant 0 : index
    %c127_107 = arith.constant 127 : index
    %146 = vector.load %arg6[%c0_106, %c127_107] : memref<8x512xf32, #tpu.memory_space<vmem>>, vector<8x256xf32>
    %cst_108 = arith.constant 0.000000e+00 : f32
    %147 = vector.broadcast %cst_108 : f32 to vector<8x256xf32>
    %148 = arith.select %37, %146, %147 : vector<8x256xi1>, vector<8x256xf32>
    %c168 = arith.constant 168 : index
    %c0_109 = arith.constant 0 : index
    %149 = vector.load %arg5[%c168, %c0_109] : memref<360x256xf32, #tpu.memory_space<vmem>>, vector<8x256xf32>
    tpu.vector_store %arg5[%c168, %c0_109], %148 {strides = array<i32>} : memref<360x256xf32, #tpu.memory_space<vmem>>, vector<8x256xf32>,
    %c176 = arith.constant 176 : index
    %c0_110 = arith.constant 0 : index
    %150 = vector.load %arg5[%c176, %c0_110] : memref<360x256xf32, #tpu.memory_space<vmem>>, vector<8x256xf32>
    tpu.vector_store %arg5[%c176, %c0_110], %132 {strides = array<i32>} : memref<360x256xf32, #tpu.memory_space<vmem>>, vector<8x256xf32>,
    %c0_111 = arith.constant 0 : index
    %c129_112 = arith.constant 129 : index
    %151 = vector.load %arg6[%c0_111, %c129_112] : memref<8x512xf32, #tpu.memory_space<vmem>>, vector<8x256xf32>
    %cst_113 = arith.constant 0.000000e+00 : f32
    %152 = vector.broadcast %cst_113 : f32 to vector<8x256xf32>
    %153 = arith.select %39, %151, %152 : vector<8x256xi1>, vector<8x256xf32>
    %c184 = arith.constant 184 : index
    %c0_114 = arith.constant 0 : index
    %154 = vector.load %arg5[%c184, %c0_114] : memref<360x256xf32, #tpu.memory_space<vmem>>, vector<8x256xf32>
    tpu.vector_store %arg5[%c184, %c0_114], %153 {strides = array<i32>} : memref<360x256xf32, #tpu.memory_space<vmem>>, vector<8x256xf32>,
    %c0_115 = arith.constant 0 : index
    %c143_116 = arith.constant 143 : index
    %155 = vector.load %arg6[%c0_115, %c143_116] : memref<8x512xf32, #tpu.memory_space<vmem>>, vector<8x256xf32>
    %cst_117 = arith.constant 0.000000e+00 : f32
    %156 = vector.broadcast %cst_117 : f32 to vector<8x256xf32>
    %157 = arith.select %46, %155, %156 : vector<8x256xi1>, vector<8x256xf32>
    %c192 = arith.constant 192 : index
    %c0_118 = arith.constant 0 : index
    %158 = vector.load %arg5[%c192, %c0_118] : memref<360x256xf32, #tpu.memory_space<vmem>>, vector<8x256xf32>
    tpu.vector_store %arg5[%c192, %c0_118], %157 {strides = array<i32>} : memref<360x256xf32, #tpu.memory_space<vmem>>, vector<8x256xf32>,
    %c0_119 = arith.constant 0 : index
    %c144_120 = arith.constant 144 : index
    %159 = vector.load %arg6[%c0_119, %c144_120] : memref<8x512xf32, #tpu.memory_space<vmem>>, vector<8x256xf32>
    %cst_121 = arith.constant 0.000000e+00 : f32
    %160 = vector.broadcast %cst_121 : f32 to vector<8x256xf32>
    %161 = arith.select %43, %159, %160 : vector<8x256xi1>, vector<8x256xf32>
    %c200 = arith.constant 200 : index
    %c0_122 = arith.constant 0 : index
    %162 = vector.load %arg5[%c200, %c0_122] : memref<360x256xf32, #tpu.memory_space<vmem>>, vector<8x256xf32>
    tpu.vector_store %arg5[%c200, %c0_122], %161 {strides = array<i32>} : memref<360x256xf32, #tpu.memory_space<vmem>>, vector<8x256xf32>,
    %c0_123 = arith.constant 0 : index
    %c145_124 = arith.constant 145 : index
    %163 = vector.load %arg6[%c0_123, %c145_124] : memref<8x512xf32, #tpu.memory_space<vmem>>, vector<8x256xf32>
    %cst_125 = arith.constant 0.000000e+00 : f32
    %164 = vector.broadcast %cst_125 : f32 to vector<8x256xf32>
    %165 = arith.select %47, %163, %164 : vector<8x256xi1>, vector<8x256xf32>
    %c208 = arith.constant 208 : index
    %c0_126 = arith.constant 0 : index
    %166 = vector.load %arg5[%c208, %c0_126] : memref<360x256xf32, #tpu.memory_space<vmem>>, vector<8x256xf32>
    tpu.vector_store %arg5[%c208, %c0_126], %165 {strides = array<i32>} : memref<360x256xf32, #tpu.memory_space<vmem>>, vector<8x256xf32>,
    %c0_127 = arith.constant 0 : index
    %c216 = arith.constant 216 : index
    %167 = vector.load %arg2[%c0_127, %c216] : memref<8x1152xf32, #tpu.memory_space<vmem>>, vector<8x216xf32>
    %c0_128 = arith.constant 0 : index
    %c0_129 = arith.constant 0 : index
    %168 = vector.load %arg5[%c0_128, %c0_129] : memref<360x256xf32, #tpu.memory_space<vmem>>, vector<216x256xf32>
    %cst_130 = arith.constant dense<0.000000e+00> : vector<8x256xf32>
    %169 = tpu.matmul %167, %168, %cst_130 {dimension_numbers = #tpu.dot_dimension_numbers<[1], [0], [0], [1], [0, 0, 1, 1], [], []>} : vector<8x216xf32>, vector<216x256xf32>, vector<8x256xf32> -> vector<8x256xf32>
    %c0_131 = arith.constant 0 : index
    %c2 = arith.constant 2 : index
    %170 = vector.load %arg3[%c0_131, %c2] : memref<8x128xf32, #tpu.memory_space<vmem>>, vector<8x1xf32>
    %171 = vector.broadcast %170 : vector<8x1xf32> to vector<8x256xf32>
    %172 = arith.addf %169, %171 : vector<8x256xf32>
    %cst_132 = arith.constant 0.000000e+00 : f32
    %173 = vector.broadcast %cst_132 : f32 to vector<8x256xf32>
    %174 = arith.maximumf %172, %173 : vector<8x256xf32>
    %c0_133 = arith.constant 0 : index
    %c128_134 = arith.constant 128 : index
    %175 = vector.load %arg6[%c0_133, %c128_134] : memref<8x512xf32, #tpu.memory_space<vmem>>, vector<8x256xf32>
    tpu.vector_store %arg6[%c0_133, %c128_134], %174 {strides = array<i32>} : memref<8x512xf32, #tpu.memory_space<vmem>>, vector<8x256xf32>,
    %c0_135 = arith.constant 0 : index
    %c111_136 = arith.constant 111 : index
    %176 = vector.load %arg6[%c0_135, %c111_136] : memref<8x512xf32, #tpu.memory_space<vmem>>, vector<8x256xf32>
    %cst_137 = arith.constant 0.000000e+00 : f32
    %177 = vector.broadcast %cst_137 : f32 to vector<8x256xf32>
    %178 = arith.select %44, %176, %177 : vector<8x256xi1>, vector<8x256xf32>
    %c216_138 = arith.constant 216 : index
    %c0_139 = arith.constant 0 : index
    %179 = vector.load %arg5[%c216_138, %c0_139] : memref<360x256xf32, #tpu.memory_space<vmem>>, vector<8x256xf32>
    tpu.vector_store %arg5[%c216_138, %c0_139], %178 {strides = array<i32>} : memref<360x256xf32, #tpu.memory_space<vmem>>, vector<8x256xf32>,
    %c0_140 = arith.constant 0 : index
    %c112_141 = arith.constant 112 : index
    %180 = vector.load %arg6[%c0_140, %c112_141] : memref<8x512xf32, #tpu.memory_space<vmem>>, vector<8x256xf32>
    %cst_142 = arith.constant 0.000000e+00 : f32
    %181 = vector.broadcast %cst_142 : f32 to vector<8x256xf32>
    %182 = arith.select %41, %180, %181 : vector<8x256xi1>, vector<8x256xf32>
    %c224 = arith.constant 224 : index
    %c0_143 = arith.constant 0 : index
    %183 = vector.load %arg5[%c224, %c0_143] : memref<360x256xf32, #tpu.memory_space<vmem>>, vector<8x256xf32>
    tpu.vector_store %arg5[%c224, %c0_143], %182 {strides = array<i32>} : memref<360x256xf32, #tpu.memory_space<vmem>>, vector<8x256xf32>,
    %c0_144 = arith.constant 0 : index
    %c113_145 = arith.constant 113 : index
    %184 = vector.load %arg6[%c0_144, %c113_145] : memref<8x512xf32, #tpu.memory_space<vmem>>, vector<8x256xf32>
    %cst_146 = arith.constant 0.000000e+00 : f32
    %185 = vector.broadcast %cst_146 : f32 to vector<8x256xf32>
    %186 = arith.select %45, %184, %185 : vector<8x256xi1>, vector<8x256xf32>
    %c232 = arith.constant 232 : index
    %c0_147 = arith.constant 0 : index
    %187 = vector.load %arg5[%c232, %c0_147] : memref<360x256xf32, #tpu.memory_space<vmem>>, vector<8x256xf32>
    tpu.vector_store %arg5[%c232, %c0_147], %186 {strides = array<i32>} : memref<360x256xf32, #tpu.memory_space<vmem>>, vector<8x256xf32>,
    %c0_148 = arith.constant 0 : index
    %c127_149 = arith.constant 127 : index
    %188 = vector.load %arg6[%c0_148, %c127_149] : memref<8x512xf32, #tpu.memory_space<vmem>>, vector<8x256xf32>
    %cst_150 = arith.constant 0.000000e+00 : f32
    %189 = vector.broadcast %cst_150 : f32 to vector<8x256xf32>
    %190 = arith.select %37, %188, %189 : vector<8x256xi1>, vector<8x256xf32>
    %c240 = arith.constant 240 : index
    %c0_151 = arith.constant 0 : index
    %191 = vector.load %arg5[%c240, %c0_151] : memref<360x256xf32, #tpu.memory_space<vmem>>, vector<8x256xf32>
    tpu.vector_store %arg5[%c240, %c0_151], %190 {strides = array<i32>} : memref<360x256xf32, #tpu.memory_space<vmem>>, vector<8x256xf32>,
    %c248 = arith.constant 248 : index
    %c0_152 = arith.constant 0 : index
    %192 = vector.load %arg5[%c248, %c0_152] : memref<360x256xf32, #tpu.memory_space<vmem>>, vector<8x256xf32>
    tpu.vector_store %arg5[%c248, %c0_152], %174 {strides = array<i32>} : memref<360x256xf32, #tpu.memory_space<vmem>>, vector<8x256xf32>,
    %c0_153 = arith.constant 0 : index
    %c129_154 = arith.constant 129 : index
    %193 = vector.load %arg6[%c0_153, %c129_154] : memref<8x512xf32, #tpu.memory_space<vmem>>, vector<8x256xf32>
    %cst_155 = arith.constant 0.000000e+00 : f32
    %194 = vector.broadcast %cst_155 : f32 to vector<8x256xf32>
    %195 = arith.select %39, %193, %194 : vector<8x256xi1>, vector<8x256xf32>
    %c256 = arith.constant 256 : index
    %c0_156 = arith.constant 0 : index
    %196 = vector.load %arg5[%c256, %c0_156] : memref<360x256xf32, #tpu.memory_space<vmem>>, vector<8x256xf32>
    tpu.vector_store %arg5[%c256, %c0_156], %195 {strides = array<i32>} : memref<360x256xf32, #tpu.memory_space<vmem>>, vector<8x256xf32>,
    %c0_157 = arith.constant 0 : index
    %c143_158 = arith.constant 143 : index
    %197 = vector.load %arg6[%c0_157, %c143_158] : memref<8x512xf32, #tpu.memory_space<vmem>>, vector<8x256xf32>
    %cst_159 = arith.constant 0.000000e+00 : f32
    %198 = vector.broadcast %cst_159 : f32 to vector<8x256xf32>
    %199 = arith.select %46, %197, %198 : vector<8x256xi1>, vector<8x256xf32>
    %c264 = arith.constant 264 : index
    %c0_160 = arith.constant 0 : index
    %200 = vector.load %arg5[%c264, %c0_160] : memref<360x256xf32, #tpu.memory_space<vmem>>, vector<8x256xf32>
    tpu.vector_store %arg5[%c264, %c0_160], %199 {strides = array<i32>} : memref<360x256xf32, #tpu.memory_space<vmem>>, vector<8x256xf32>,
    %c0_161 = arith.constant 0 : index
    %c144_162 = arith.constant 144 : index
    %201 = vector.load %arg6[%c0_161, %c144_162] : memref<8x512xf32, #tpu.memory_space<vmem>>, vector<8x256xf32>
    %cst_163 = arith.constant 0.000000e+00 : f32
    %202 = vector.broadcast %cst_163 : f32 to vector<8x256xf32>
    %203 = arith.select %43, %201, %202 : vector<8x256xi1>, vector<8x256xf32>
    %c272 = arith.constant 272 : index
    %c0_164 = arith.constant 0 : index
    %204 = vector.load %arg5[%c272, %c0_164] : memref<360x256xf32, #tpu.memory_space<vmem>>, vector<8x256xf32>
    tpu.vector_store %arg5[%c272, %c0_164], %203 {strides = array<i32>} : memref<360x256xf32, #tpu.memory_space<vmem>>, vector<8x256xf32>,
    %c0_165 = arith.constant 0 : index
    %c145_166 = arith.constant 145 : index
    %205 = vector.load %arg6[%c0_165, %c145_166] : memref<8x512xf32, #tpu.memory_space<vmem>>, vector<8x256xf32>
    %cst_167 = arith.constant 0.000000e+00 : f32
    %206 = vector.broadcast %cst_167 : f32 to vector<8x256xf32>
    %207 = arith.select %47, %205, %206 : vector<8x256xi1>, vector<8x256xf32>
    %c280 = arith.constant 280 : index
    %c0_168 = arith.constant 0 : index
    %208 = vector.load %arg5[%c280, %c0_168] : memref<360x256xf32, #tpu.memory_space<vmem>>, vector<8x256xf32>
    tpu.vector_store %arg5[%c280, %c0_168], %207 {strides = array<i32>} : memref<360x256xf32, #tpu.memory_space<vmem>>, vector<8x256xf32>,
    %c0_169 = arith.constant 0 : index
    %c432 = arith.constant 432 : index
    %209 = vector.load %arg2[%c0_169, %c432] : memref<8x1152xf32, #tpu.memory_space<vmem>>, vector<8x288xf32>
    %c0_170 = arith.constant 0 : index
    %c0_171 = arith.constant 0 : index
    %210 = vector.load %arg5[%c0_170, %c0_171] : memref<360x256xf32, #tpu.memory_space<vmem>>, vector<288x256xf32>
    %cst_172 = arith.constant dense<0.000000e+00> : vector<8x256xf32>
    %211 = tpu.matmul %209, %210, %cst_172 {dimension_numbers = #tpu.dot_dimension_numbers<[1], [0], [0], [1], [0, 0, 1, 1], [], []>} : vector<8x288xf32>, vector<288x256xf32>, vector<8x256xf32> -> vector<8x256xf32>
    %c0_173 = arith.constant 0 : index
    %c3 = arith.constant 3 : index
    %212 = vector.load %arg3[%c0_173, %c3] : memref<8x128xf32, #tpu.memory_space<vmem>>, vector<8x1xf32>
    %213 = vector.broadcast %212 : vector<8x1xf32> to vector<8x256xf32>
    %214 = arith.addf %211, %213 : vector<8x256xf32>
    %cst_174 = arith.constant 0.000000e+00 : f32
    %215 = vector.broadcast %cst_174 : f32 to vector<8x256xf32>
    %216 = arith.maximumf %214, %215 : vector<8x256xf32>
    %c0_175 = arith.constant 0 : index
    %c128_176 = arith.constant 128 : index
    %217 = vector.load %arg6[%c0_175, %c128_176] : memref<8x512xf32, #tpu.memory_space<vmem>>, vector<8x256xf32>
    tpu.vector_store %arg6[%c0_175, %c128_176], %216 {strides = array<i32>} : memref<8x512xf32, #tpu.memory_space<vmem>>, vector<8x256xf32>,
    %c0_177 = arith.constant 0 : index
    %c111_178 = arith.constant 111 : index
    %218 = vector.load %arg6[%c0_177, %c111_178] : memref<8x512xf32, #tpu.memory_space<vmem>>, vector<8x256xf32>
    %cst_179 = arith.constant 0.000000e+00 : f32
    %219 = vector.broadcast %cst_179 : f32 to vector<8x256xf32>
    %220 = arith.select %44, %218, %219 : vector<8x256xi1>, vector<8x256xf32>
    %c288 = arith.constant 288 : index
    %c0_180 = arith.constant 0 : index
    %221 = vector.load %arg5[%c288, %c0_180] : memref<360x256xf32, #tpu.memory_space<vmem>>, vector<8x256xf32>
    tpu.vector_store %arg5[%c288, %c0_180], %220 {strides = array<i32>} : memref<360x256xf32, #tpu.memory_space<vmem>>, vector<8x256xf32>,
    %c0_181 = arith.constant 0 : index
    %c112_182 = arith.constant 112 : index
    %222 = vector.load %arg6[%c0_181, %c112_182] : memref<8x512xf32, #tpu.memory_space<vmem>>, vector<8x256xf32>
    %cst_183 = arith.constant 0.000000e+00 : f32
    %223 = vector.broadcast %cst_183 : f32 to vector<8x256xf32>
    %224 = arith.select %41, %222, %223 : vector<8x256xi1>, vector<8x256xf32>
    %c296 = arith.constant 296 : index
    %c0_184 = arith.constant 0 : index
    %225 = vector.load %arg5[%c296, %c0_184] : memref<360x256xf32, #tpu.memory_space<vmem>>, vector<8x256xf32>
    tpu.vector_store %arg5[%c296, %c0_184], %224 {strides = array<i32>} : memref<360x256xf32, #tpu.memory_space<vmem>>, vector<8x256xf32>,
    %c0_185 = arith.constant 0 : index
    %c113_186 = arith.constant 113 : index
    %226 = vector.load %arg6[%c0_185, %c113_186] : memref<8x512xf32, #tpu.memory_space<vmem>>, vector<8x256xf32>
    %cst_187 = arith.constant 0.000000e+00 : f32
    %227 = vector.broadcast %cst_187 : f32 to vector<8x256xf32>
    %228 = arith.select %45, %226, %227 : vector<8x256xi1>, vector<8x256xf32>
    %c304 = arith.constant 304 : index
    %c0_188 = arith.constant 0 : index
    %229 = vector.load %arg5[%c304, %c0_188] : memref<360x256xf32, #tpu.memory_space<vmem>>, vector<8x256xf32>
    tpu.vector_store %arg5[%c304, %c0_188], %228 {strides = array<i32>} : memref<360x256xf32, #tpu.memory_space<vmem>>, vector<8x256xf32>,
    %c0_189 = arith.constant 0 : index
    %c127_190 = arith.constant 127 : index
    %230 = vector.load %arg6[%c0_189, %c127_190] : memref<8x512xf32, #tpu.memory_space<vmem>>, vector<8x256xf32>
    %cst_191 = arith.constant 0.000000e+00 : f32
    %231 = vector.broadcast %cst_191 : f32 to vector<8x256xf32>
    %232 = arith.select %37, %230, %231 : vector<8x256xi1>, vector<8x256xf32>
    %c312 = arith.constant 312 : index
    %c0_192 = arith.constant 0 : index
    %233 = vector.load %arg5[%c312, %c0_192] : memref<360x256xf32, #tpu.memory_space<vmem>>, vector<8x256xf32>
    tpu.vector_store %arg5[%c312, %c0_192], %232 {strides = array<i32>} : memref<360x256xf32, #tpu.memory_space<vmem>>, vector<8x256xf32>,
    %c320 = arith.constant 320 : index
    %c0_193 = arith.constant 0 : index
    %234 = vector.load %arg5[%c320, %c0_193] : memref<360x256xf32, #tpu.memory_space<vmem>>, vector<8x256xf32>
    tpu.vector_store %arg5[%c320, %c0_193], %216 {strides = array<i32>} : memref<360x256xf32, #tpu.memory_space<vmem>>, vector<8x256xf32>,
    %c0_194 = arith.constant 0 : index
    %c129_195 = arith.constant 129 : index
    %235 = vector.load %arg6[%c0_194, %c129_195] : memref<8x512xf32, #tpu.memory_space<vmem>>, vector<8x256xf32>
    %cst_196 = arith.constant 0.000000e+00 : f32
    %236 = vector.broadcast %cst_196 : f32 to vector<8x256xf32>
    %237 = arith.select %39, %235, %236 : vector<8x256xi1>, vector<8x256xf32>
    %c328 = arith.constant 328 : index
    %c0_197 = arith.constant 0 : index
    %238 = vector.load %arg5[%c328, %c0_197] : memref<360x256xf32, #tpu.memory_space<vmem>>, vector<8x256xf32>
    tpu.vector_store %arg5[%c328, %c0_197], %237 {strides = array<i32>} : memref<360x256xf32, #tpu.memory_space<vmem>>, vector<8x256xf32>,
    %c0_198 = arith.constant 0 : index
    %c143_199 = arith.constant 143 : index
    %239 = vector.load %arg6[%c0_198, %c143_199] : memref<8x512xf32, #tpu.memory_space<vmem>>, vector<8x256xf32>
    %cst_200 = arith.constant 0.000000e+00 : f32
    %240 = vector.broadcast %cst_200 : f32 to vector<8x256xf32>
    %241 = arith.select %46, %239, %240 : vector<8x256xi1>, vector<8x256xf32>
    %c336 = arith.constant 336 : index
    %c0_201 = arith.constant 0 : index
    %242 = vector.load %arg5[%c336, %c0_201] : memref<360x256xf32, #tpu.memory_space<vmem>>, vector<8x256xf32>
    tpu.vector_store %arg5[%c336, %c0_201], %241 {strides = array<i32>} : memref<360x256xf32, #tpu.memory_space<vmem>>, vector<8x256xf32>,
    %c0_202 = arith.constant 0 : index
    %c144_203 = arith.constant 144 : index
    %243 = vector.load %arg6[%c0_202, %c144_203] : memref<8x512xf32, #tpu.memory_space<vmem>>, vector<8x256xf32>
    %cst_204 = arith.constant 0.000000e+00 : f32
    %244 = vector.broadcast %cst_204 : f32 to vector<8x256xf32>
    %245 = arith.select %43, %243, %244 : vector<8x256xi1>, vector<8x256xf32>
    %c344 = arith.constant 344 : index
    %c0_205 = arith.constant 0 : index
    %246 = vector.load %arg5[%c344, %c0_205] : memref<360x256xf32, #tpu.memory_space<vmem>>, vector<8x256xf32>
    tpu.vector_store %arg5[%c344, %c0_205], %245 {strides = array<i32>} : memref<360x256xf32, #tpu.memory_space<vmem>>, vector<8x256xf32>,
    %c0_206 = arith.constant 0 : index
    %c145_207 = arith.constant 145 : index
    %247 = vector.load %arg6[%c0_206, %c145_207] : memref<8x512xf32, #tpu.memory_space<vmem>>, vector<8x256xf32>
    %cst_208 = arith.constant 0.000000e+00 : f32
    %248 = vector.broadcast %cst_208 : f32 to vector<8x256xf32>
    %249 = arith.select %47, %247, %248 : vector<8x256xi1>, vector<8x256xf32>
    %c352 = arith.constant 352 : index
    %c0_209 = arith.constant 0 : index
    %250 = vector.load %arg5[%c352, %c0_209] : memref<360x256xf32, #tpu.memory_space<vmem>>, vector<8x256xf32>
    tpu.vector_store %arg5[%c352, %c0_209], %249 {strides = array<i32>} : memref<360x256xf32, #tpu.memory_space<vmem>>, vector<8x256xf32>,
    %c0_210 = arith.constant 0 : index
    %c720 = arith.constant 720 : index
    %251 = vector.load %arg2[%c0_210, %c720] : memref<8x1152xf32, #tpu.memory_space<vmem>>, vector<8x360xf32>
    %c0_211 = arith.constant 0 : index
    %c0_212 = arith.constant 0 : index
    %252 = vector.load %arg5[%c0_211, %c0_212] : memref<360x256xf32, #tpu.memory_space<vmem>>, vector<360x256xf32>
    %cst_213 = arith.constant dense<0.000000e+00> : vector<8x256xf32>
    %253 = tpu.matmul %251, %252, %cst_213 {dimension_numbers = #tpu.dot_dimension_numbers<[1], [0], [0], [1], [0, 0, 1, 1], [], []>} : vector<8x360xf32>, vector<360x256xf32>, vector<8x256xf32> -> vector<8x256xf32>
    %c0_214 = arith.constant 0 : index
    %c4 = arith.constant 4 : index
    %254 = vector.load %arg3[%c0_214, %c4] : memref<8x128xf32, #tpu.memory_space<vmem>>, vector<8x1xf32>
    %255 = vector.broadcast %254 : vector<8x1xf32> to vector<8x256xf32>
    %256 = arith.addf %253, %255 : vector<8x256xf32>
    %cst_215 = arith.constant 2.000000e-01 : f32
    %257 = vector.broadcast %cst_215 : f32 to vector<8x256xf32>
    %258 = arith.mulf %256, %257 : vector<8x256xf32>
    %259 = arith.addf %258, %48 : vector<8x256xf32>
    %c0_216 = arith.constant 0 : index
    %c0_217 = arith.constant 0 : index
    %260 = vector.load %arg4[%c0_216, %c0_217] : memref<8x256xf32, #tpu.memory_space<vmem>>, vector<8x256xf32>
    tpu.vector_store %arg4[%c0_216, %c0_217], %259 {strides = array<i32>} : memref<8x256xf32, #tpu.memory_space<vmem>>, vector<8x256xf32>,
    return
  }
  func.func @transform_0(%arg0: i32) -> (i32, i32) {
    %c0_i32 = arith.constant 0 : i32
    %c0_i32_0 = arith.constant 0 : i32
    return %c0_i32, %arg0 : i32, i32
  }
  func.func @transform_1(%arg0: i32) -> (i32, i32) {
    %c0_i32 = arith.constant 0 : i32
    %c0_i32_0 = arith.constant 0 : i32
    %c0_i32_1 = arith.constant 0 : i32
    return %c0_i32, %c0_i32_0 : i32, i32
  }
  func.func @transform_2(%arg0: i32) -> (i32, i32) {
    %c0_i32 = arith.constant 0 : i32
    %c0_i32_0 = arith.constant 0 : i32
    %c0_i32_1 = arith.constant 0 : i32
    return %c0_i32, %c0_i32_0 : i32, i32
  }
  func.func @transform_3(%arg0: i32) -> (i32, i32) {
    %c0_i32 = arith.constant 0 : i32
    %c0_i32_0 = arith.constant 0 : i32
    return %c0_i32, %arg0 : i32, i32
  }
}

</mosaic_0001>

<llo_original>
// kernel: tpu_custom_call.1
$region0: #{tpu_custom_call.1}
  #allocation0 [shape = 'u32[]', space=smem, size = 0x4, offset = 0x4, fixed_abs, tag = 'smem constant byte address 0x4 - core index']
  #allocation1 [shape = 'u32[144,128]{1,0:T(1,128)}', space=vmem, size = 0x12000, scoped, tag = 'internal scratch']
  #allocation2 [shape = 'f32[360,256]{1,0:T(8,128)}', space=vmem, size = 0x5a000, scoped, tag = 'scratch operand']
  #allocation3 [shape = 'f32[8,512]{1,0:T(8,128)}', space=vmem, size = 0x4000, scoped, tag = 'scratch operand']
  %s0 = inlined_call_operand.hbm [shape: f32[8,512], index: 0, kind: input, shape index: {}]
  %s1 = inlined_call_operand.hbm [shape: f32[8,1152], index: 1, kind: input, shape index: {}]
  %s2 = inlined_call_operand.hbm [shape: f32[8,128], index: 2, kind: input, shape index: {}]
  %s3 = inlined_call_operand.hbm [shape: f32[8,512], index: 3, kind: output, shape index: {}]
  %s4 = sld [smem:[#allocation0]]
  $region61: #{tpu_custom_call.1} parent=0
    _
  %s6 = ssub.s32 1, %s4
  %s7 = scalar_select 0, %s6, %s4
  $region1: #{tpu_custom_call.1} parent=0
    #allocation4 [shape = 'u8[16384]{0}', space=vmem, size = 0x4000, scoped, tag = 'input window, operand 0']
    #allocation5 [shape = 's32[2]{0}', space=sflag, size = 0x8, scoped, tag = 'scoped memory for tpu_custom_call.1']
    #allocation6 [shape = 's32[2]{0}', space=sflag, size = 0x8, scoped, tag = 'scoped memory for tpu_custom_call.1']
    #allocation7 [shape = 'u8[36864]{0}', space=vmem, size = 0x9000, scoped, tag = 'input window, operand 1, single buffered']
    #allocation8 [shape = 's32[1]{0}', space=sflag, size = 0x4, scoped, tag = 'scoped memory for tpu_custom_call.1']
    #allocation9 [shape = 'u8[4096]{0}', space=vmem, size = 0x1000, scoped, tag = 'input window, operand 2, single buffered']
    #allocation10 [shape = 'u8[16384]{0}', space=vmem, size = 0x4000, scoped, tag = 'output window, operand 0']
    %8 = vsyncpa [#allocation5], 0
    %s9 = scalar_lea.sflag [#allocation5], 1
    %10 = vsyncpa %s9, 0
    %11 = vsyncpa [#allocation8], 0
    %12 = vsyncpa [#allocation6], 0
    %s13 = scalar_lea.sflag [#allocation6], 1
    %14 = vsyncpa %s13, 0
    loop: start=0, step=1, limit=4
    $region2: #{tpu_custom_call.1} parent=1 // loop_pre_header
      _
    $region3: #{tpu_custom_call.1} parent=1 // loop_header
      %s16 = sphi 0, %s20
      %p17 = scmp.ge.s32.totalorder %s16, 4
      %s26 = sphi 0, %s28
      %s29 = sphi 0, %s26
      %s30 = sphi 0, %s29
      %s46 = sphi 0, %s30
      %s50 = sphi 0, %s50
      %s52 = sphi 0, %s50
      %s53 = sphi 0, %s52
      %s67 = sphi 0, %s53
      %s71 = sphi 0, %s71
      %s73 = sphi 0, %s71
      %s74 = sphi 0, %s73
      %s88 = sphi 0, %s74
      %s94 = sphi 0, %s96
      %s97 = sphi 0, %s94
      %s98 = sphi 0, %s97
      %s114 = sphi 0, %s98
    $region4: #{tpu_custom_call.1} parent=1 // loop_header_branch
      %19 = sbr.rel (%p17) target = $region8
    $region5: #{tpu_custom_call.1} parent=1 // loop_body
      %s21 = ssub.s32 %s16, 1
      %s22 = ssub.s32 %s16, 2
      %s23 = sadd.s32 %s16, 1
      %s24 = ssub.s32 %s16, %s23
      %p25 = scmp.eq.s32.totalorder %s24, 0
      %s27 = sadd.s32 %s26, 1
      %s28 = scalar_select %p25, %s26, %s27
      %p31 = pneg %p25
      %p32 = scmp.eq.s32.totalorder %s16, 1
      %p33 = por %p31, %p32
      %p34 = scmp.ne.s32.totalorder %s26, %s29
      %p35 = scmp.eq.s32.totalorder %s16, 0
      %p36 = por %p34, %p35
      %p37 = scmp.ne.s32.totalorder %s26, %s29
      %p38 = scmp.eq.s32.totalorder %s21, 1
      %p39 = por %p37, %p38
      %p40 = scmp.ne.s32.totalorder %s29, %s30
      %p41 = scmp.eq.s32.totalorder %s21, 0
      %p42 = por %p40, %p41
      %p43 = scmp.ne.s32.totalorder %s29, %s30
      %p44 = scmp.eq.s32.totalorder %s22, 1
      %p45 = por %p43, %p44
      %p47 = scmp.ne.s32.totalorder %s30, %s46
      %p48 = scmp.eq.s32.totalorder %s22, 0
      %p49 = por %p47, %p48
      %s51 = sadd.s32 %s50, 1
      %p54 = scmp.eq.s32.totalorder %s16, 1
      %p55 = scmp.ne.s32.totalorder %s50, %s52
      %p56 = scmp.eq.s32.totalorder %s16, 0
      %p57 = por %p55, %p56
      %p58 = scmp.ne.s32.totalorder %s50, %s52
      %p59 = scmp.eq.s32.totalorder %s21, 1
      %p60 = por %p58, %p59
      %p61 = scmp.ne.s32.totalorder %s52, %s53
      %p62 = scmp.eq.s32.totalorder %s21, 0
      %p63 = por %p61, %p62
      %p64 = scmp.ne.s32.totalorder %s52, %s53
      %p65 = scmp.eq.s32.totalorder %s22, 1
      %p66 = por %p64, %p65
      %p68 = scmp.ne.s32.totalorder %s53, %s67
      %p69 = scmp.eq.s32.totalorder %s22, 0
      %p70 = por %p68, %p69
      %s72 = sadd.s32 %s71, 1
      %p75 = scmp.eq.s32.totalorder %s16, 1
      %p76 = scmp.ne.s32.totalorder %s71, %s73
      %p77 = scmp.eq.s32.totalorder %s16, 0
      %p78 = por %p76, %p77
      %p79 = scmp.ne.s32.totalorder %s71, %s73
      %p80 = scmp.eq.s32.totalorder %s21, 1
      %p81 = por %p79, %p80
      %p82 = scmp.ne.s32.totalorder %s73, %s74
      %p83 = scmp.eq.s32.totalorder %s21, 0
      %p84 = por %p82, %p83
      %p85 = scmp.ne.s32.totalorder %s73, %s74
      %p86 = scmp.eq.s32.totalorder %s22, 1
      %p87 = por %p85, %p86
      %p89 = scmp.ne.s32.totalorder %s74, %s88
      %p90 = scmp.eq.s32.totalorder %s22, 0
      %p91 = por %p89, %p90
      %s92 = ssub.s32 %s16, %s23
      %p93 = scmp.eq.s32.totalorder %s92, 0
      %s95 = sadd.s32 %s94, 1
      %s96 = scalar_select %p93, %s94, %s95
      %p99 = pneg %p93
      %p100 = scmp.eq.s32.totalorder %s16, 1
      %p101 = por %p99, %p100
      %p102 = scmp.ne.s32.totalorder %s94, %s97
      %p103 = scmp.eq.s32.totalorder %s16, 0
      %p104 = por %p102, %p103
      %p105 = scmp.ne.s32.totalorder %s94, %s97
      %p106 = scmp.eq.s32.totalorder %s21, 1
      %p107 = por %p105, %p106
      %p108 = scmp.ne.s32.totalorder %s97, %s98
      %p109 = scmp.eq.s32.totalorder %s21, 0
      %p110 = por %p108, %p109
      %p111 = scmp.ne.s32.totalorder %s97, %s98
      %p112 = scmp.eq.s32.totalorder %s22, 1
      %p113 = por %p111, %p112
      %p115 = scmp.ne.s32.totalorder %s98, %s114
      %p116 = scmp.eq.s32.totalorder %s22, 0
      %p117 = por %p115, %p116
      %p118 = scmp.le.s32.totalorder 1, %s16
      %p119 = scmp.lt.s32.totalorder %s16, 3
      %p120 = pnand %p118, %p119
      %p121 = pneg %p120
      // Predicated region
      $region9: #{tpu_custom_call.1} parent=5 // pred_check
        _
      $region10: #{tpu_custom_call.1} parent=5 // pred_check_branch
        %123 = sbr.rel (%p120) target = $region12
      $region11: #{tpu_custom_call.1} parent=5 // pred_region
        %s124 = ssub.s32 %s16, 1
        // Predicated region
        $region13: #{tpu_custom_call.1} parent=11 // pred_check
          %p125 = pneg %p63
        $region14: #{tpu_custom_call.1} parent=11 // pred_check_branch
          %127 = sbr.rel (%p125) target = $region16
        $region15: #{tpu_custom_call.1} parent=11 // pred_region
          %s129 = ssub.s32 1152, 1152
          %130 = vsyncadd [#allocation8], %s129
          %s132 = sshll.u32 [#allocation7], 4
          %s133 = int_to_ptr.vmem [resolvable:$true] %s132
          %135 = dma.hbm_to_vmem [thread:$0]  %s1, 1152, %s133, [#allocation8]
        $region16: #{tpu_custom_call.1} parent=11 // pred_fallthru
          _
        // Predicated region
        $region17: #{tpu_custom_call.1} parent=11 // pred_check
          %p136 = pneg %p84
        $region18: #{tpu_custom_call.1} parent=11 // pred_check_branch
          %138 = sbr.rel (%p136) target = $region20
        $region19: #{tpu_custom_call.1} parent=11 // pred_region
          %s140 = ssub.s32 128, 128
          %141 = vsyncadd [#allocation8], %s140
          %s143 = sshll.u32 [#allocation9], 4
          %s144 = int_to_ptr.vmem [resolvable:$true] %s143
          %146 = dma.hbm_to_vmem [thread:$0]  %s2, 128, %s144, [#allocation8]
        $region20: #{tpu_custom_call.1} parent=11 // pred_fallthru
          _
      $region12: #{tpu_custom_call.1} parent=5 // pred_fallthru
        _
      %p147 = scmp.lt.s32.totalorder %s16, 2
      // Predicated region
      $region21: #{tpu_custom_call.1} parent=5 // pred_check
        %p148 = pneg %p147
      $region22: #{tpu_custom_call.1} parent=5 // pred_check_branch
        %150 = sbr.rel (%p148) target = $region24
      $region23: #{tpu_custom_call.1} parent=5 // pred_region
        // Predicated region
        $region25: #{tpu_custom_call.1} parent=23 // pred_check
          %p151 = pneg %p36
        $region26: #{tpu_custom_call.1} parent=23 // pred_check_branch
          %153 = sbr.rel (%p151) target = $region28
        $region27: #{tpu_custom_call.1} parent=23 // pred_region
          %s154 = sand.u32 %s26, 1
          %s155 = scalar_lea.sflag [#allocation5], %s154
          %s156 = sand.u32 %s26, 1
          %s157 = smul.addr %s156, 16
          %s158 = scalar_lea.vmem [#allocation4], %s157
          %s159 = smul.u32 2, %s16
          %s161 = ssub.s32 256, 256
          %162 = vsyncadd %s155, %s161
          %s163 = smul.addr %s159, 128
          %s164 = scalar_lea.hbm %s0, %s163
          %s166 = sshll.u32 %s158, 4
          %s167 = int_to_ptr.vmem [resolvable:$true] %s166
          %169 = dma.hbm_to_vmem [thread:$0]  %s164, 256, %s167, %s155
        $region28: #{tpu_custom_call.1} parent=23 // pred_fallthru
          _
      $region24: #{tpu_custom_call.1} parent=5 // pred_fallthru
        _
      %p170 = scmp.le.s32.totalorder 1, %s16
      %p171 = scmp.lt.s32.totalorder %s16, 3
      %p172 = pnand %p170, %p171
      %p173 = pneg %p172
      // Predicated region
      $region29: #{tpu_custom_call.1} parent=5 // pred_check
        _
      $region30: #{tpu_custom_call.1} parent=5 // pred_check_branch
        %175 = sbr.rel (%p172) target = $region32
      $region31: #{tpu_custom_call.1} parent=5 // pred_region
        %s176 = ssub.s32 %s16, 1
        %s177 = sand.u32 %s29, 1
        %s178 = scalar_lea.sflag [#allocation5], %s177
        %s179 = sand.u32 %s29, 1
        %s180 = smul.addr %s179, 16
        %s181 = scalar_lea.vmem [#allocation4], %s180
        // Predicated region
        $region33: #{tpu_custom_call.1} parent=31 // pred_check
          %p182 = pneg %p42
        $region34: #{tpu_custom_call.1} parent=31 // pred_check_branch
          %184 = sbr.rel (%p182) target = $region36
        $region35: #{tpu_custom_call.1} parent=31 // pred_region
          %185 = dma.done %s178, 256
        $region36: #{tpu_custom_call.1} parent=31 // pred_fallthru
          _
        // Predicated region
        $region37: #{tpu_custom_call.1} parent=31 // pred_check
          %p186 = pneg %p63
        $region38: #{tpu_custom_call.1} parent=31 // pred_check_branch
          %188 = sbr.rel (%p186) target = $region40
        $region39: #{tpu_custom_call.1} parent=31 // pred_region
          %189 = dma.done [#allocation8], 1152
        $region40: #{tpu_custom_call.1} parent=31 // pred_fallthru
          _
        // Predicated region
        $region41: #{tpu_custom_call.1} parent=31 // pred_check
          %p190 = pneg %p84
        $region42: #{tpu_custom_call.1} parent=31 // pred_check_branch
          %192 = sbr.rel (%p190) target = $region44
        $region43: #{tpu_custom_call.1} parent=31 // pred_region
          %193 = dma.done [#allocation8], 128
        $region44: #{tpu_custom_call.1} parent=31 // pred_fallthru
          _
        %s194 = sand.u32 %s29, 1
        %s195 = scalar_lea.sflag [#allocation5], %s194
        %s196 = sand.u32 %s29, 1
        %s197 = smul.addr %s196, 16
        %s198 = scalar_lea.vmem [#allocation4], %s197
        %p199 = pneg %p42
        %p200 = pneg %p39
        %p201 = pneg %p63
        %p202 = pneg %p60
        %p203 = pneg %p84
        %p204 = pneg %p81
        %p205 = pneg %p110
        %p206 = pneg %p107
        %s207 = sand.u32 %s97, 1
        %s208 = scalar_lea.sflag [#allocation6], %s207
        %s209 = sand.u32 %s97, 1
        %s210 = smul.addr %s209, 16
        %s211 = scalar_lea.vmem [#allocation10], %s210
        %s212 = smul.u32 2, %s21
        %s213 = smul.u32 2, %s21
        %p214 = scmp.eq.s32.totalorder %s21, 0
        // Predicated region
        $region45: #{tpu_custom_call.1} parent=31 // pred_check
          %p215 = pneg %p214
        $region46: #{tpu_custom_call.1} parent=31 // pred_check_branch
          %217 = sbr.rel (%p215) target = $region48
        $region47: #{tpu_custom_call.1} parent=31 // pred_region
          %218 = vst [vmem:[#allocation3] sm:$0xff] 0.0
          %219 = vst [vmem:[#allocation3 + $0x18] sm:$0xff] 0.0
        $region48: #{tpu_custom_call.1} parent=31 // pred_fallthru
          _
        %v220 = vlaneseq
        %v221 = vand.u32 %v220, 127
        %v222 = vadd.s32 %v221, 128
        %vm223 = vcmp.lt.s32.totalorder %v221, 0
        %v224 = vsub.s32 0, %v221
        %v225 = vsel %vm223, %v224, %v221
        %v226 = vshrl.u32 %v225, 8
        %v227 = vand.u32 %v225, 255
        %v228 = vsub.s32 0, %v227
        %v229 = vsel %vm223, %v228, %v227
        %vm230 = vcmp.lt.s32.totalorder %v222, 0
        %v231 = vsub.s32 0, %v222
        %v232 = vsel %vm230, %v231, %v222
        %v233 = vshrl.u32 %v232, 8
        %v234 = vand.u32 %v232, 255
        %v235 = vsub.s32 0, %v234
        %v236 = vsel %vm230, %v235, %v234
        %vm237 = vcmp.ne.s32.totalorder %v229, 0
        %vm238 = vcmp.ne.s32.totalorder %v236, 0
        %vm239 = vcmp.lt.s32.totalorder %v229, 0
        %vm240 = vcmp.lt.s32.totalorder %v236, 0
        %vm241 = vmand %vm239, %vm237
        %vm242 = vmand %vm240, %vm238
        %v243 = vadd.s32 %v229, 256
        %v244 = vadd.s32 %v236, 256
        %v245 = vsel %vm241, %v243, %v229
        %v246 = vsel %vm242, %v244, %v236
        %vm247 = vcmp.lt.s32.totalorder %v221, 0
        %v248 = vsub.s32 0, %v221
        %v249 = vsel %vm247, %v248, %v221
        %v250 = vshrl.u32 %v249, 4
        %v251 = vand.u32 %v249, 15
        %v252 = vsub.s32 0, %v251
        %v253 = vsel %vm247, %v252, %v251
        %vm254 = vcmp.lt.s32.totalorder %v222, 0
        %v255 = vsub.s32 0, %v222
        %v256 = vsel %vm254, %v255, %v222
        %v257 = vshrl.u32 %v256, 4
        %v258 = vand.u32 %v256, 15
        %v259 = vsub.s32 0, %v258
        %v260 = vsel %vm254, %v259, %v258
        %vm261 = vcmp.ne.s32.totalorder %v253, 0
        %vm262 = vcmp.ne.s32.totalorder %v260, 0
        %vm263 = vcmp.lt.s32.totalorder %v253, 0
        %vm264 = vcmp.lt.s32.totalorder %v260, 0
        %vm265 = vmand %vm263, %vm261
        %vm266 = vmand %vm264, %vm262
        %v267 = vadd.s32 %v253, 16
        %v268 = vadd.s32 %v260, 16
        %v269 = vsel %vm265, %v267, %v253
        %v270 = vsel %vm266, %v268, %v260
        %vm271 = vcmp.gt.s32.totalorder %v269, 0
        %vm272 = vcmp.gt.s32.totalorder %v270, 0
        %vm273 = vcmp.lt.s32.totalorder %v269, 15
        %vm274 = vcmp.lt.s32.totalorder %v270, 15
        %vm275 = vcmp.ge.s32.totalorder %v245, 16
        %vm276 = vcmp.ge.s32.totalorder %v246, 16
        %vm277 = vcmp.lt.s32.totalorder %v245, 240
        %vm278 = vcmp.lt.s32.totalorder %v246, 240
        %vm279 = vmand %vm275, %vm271
        %vm280 = vmand %vm276, %vm272
        %vm281 = vmand %vm275, %vm273
        %vm282 = vmand %vm276, %vm274
        %vm283 = vmand %vm277, %vm271
        %vm284 = vmand %vm278, %vm272
        %vm285 = vmand %vm277, %vm273
        %vm286 = vmand %vm278, %vm274
        %v287 = vld [vmem:[%s181] sm:$0xff]
        %v288 = vld [vmem:[%s181 + $0x8] sm:$0xff]
        %289 = vst [vmem:[#allocation3 + $0x8] sm:$0xff] %v287
        %290 = vst [vmem:[#allocation3 + $0x10] sm:$0xff] %v288
        %v291 = vld [vmem:[#allocation3] sm:$0xff]
        %v292 = vld [vmem:[#allocation3 + $0x8] sm:$0xff]
        %v293 = vld [vmem:[#allocation3 + $0x10] sm:$0xff]
        %297 = vrot.lane.b32.xlu0 %v291, 17
        %v298 = vpop.permute.xlu0 %297
        %299 = vrot.lane.b32.xlu0 %v292, 17
        %v300 = vpop.permute.xlu0 %299
        %301 = vrot.lane.b32.xlu0 %v293, 17
        %v302 = vpop.permute.xlu0 %301
        %vm303 = vcmask 138240
        %v304 = vsel %vm303, %v298, %v300
        %v305 = vsel %vm303, %v300, %v302
        %v308 = vsel %vm279, %v304, 0.0
        %v309 = vsel %vm280, %v305, 0.0
        %310 = vst [vmem:[#allocation2] sm:$0xff] %v308
        %311 = vst [vmem:[#allocation2 + $0x8] sm:$0xff] %v309
        %v312 = vld [vmem:[#allocation3] sm:$0xff]
        %v313 = vld [vmem:[#allocation3 + $0x8] sm:$0xff]
        %v314 = vld [vmem:[#allocation3 + $0x10] sm:$0xff]
        %318 = vrot.lane.b32.xlu0 %v312, 16
        %v319 = vpop.permute.xlu0 %318
        %320 = vrot.lane.b32.xlu0 %v313, 16
        %v321 = vpop.permute.xlu0 %320
        %322 = vrot.lane.b32.xlu0 %v314, 16
        %v323 = vpop.permute.xlu0 %322
        %vm324 = vcmask 130048
        %v325 = vsel %vm324, %v319, %v321
        %v326 = vsel %vm324, %v321, %v323
        %v329 = vsel %vm275, %v325, 0.0
        %v330 = vsel %vm276, %v326, 0.0
        %331 = vst [vmem:[#allocation2 + $0x10] sm:$0xff] %v329
        %332 = vst [vmem:[#allocation2 + $0x18] sm:$0xff] %v330
        %v333 = vld [vmem:[#allocation3] sm:$0xff]
        %v334 = vld [vmem:[#allocation3 + $0x8] sm:$0xff]
        %v335 = vld [vmem:[#allocation3 + $0x10] sm:$0xff]
        %339 = vrot.lane.b32.xlu0 %v333, 15
        %v340 = vpop.permute.xlu0 %339
        %341 = vrot.lane.b32.xlu0 %v334, 15
        %v342 = vpop.permute.xlu0 %341
        %343 = vrot.lane.b32.xlu0 %v335, 15
        %v344 = vpop.permute.xlu0 %343
        %vm345 = vcmask 121856
        %v346 = vsel %vm345, %v340, %v342
        %v347 = vsel %vm345, %v342, %v344
        %v350 = vsel %vm281, %v346, 0.0
        %v351 = vsel %vm282, %v347, 0.0
        %352 = vst [vmem:[#allocation2 + $0x20] sm:$0xff] %v350
        %353 = vst [vmem:[#allocation2 + $0x28] sm:$0xff] %v351
        %v354 = vld [vmem:[#allocation3] sm:$0xff]
        %v355 = vld [vmem:[#allocation3 + $0x8] sm:$0xff]
        %v356 = vld [vmem:[#allocation3 + $0x10] sm:$0xff]
        %360 = vrot.lane.b32.xlu0 %v354, 1
        %v361 = vpop.permute.xlu0 %360
        %362 = vrot.lane.b32.xlu0 %v355, 1
        %v363 = vpop.permute.xlu0 %362
        %364 = vrot.lane.b32.xlu0 %v356, 1
        %v365 = vpop.permute.xlu0 %364
        %vm366 = vcmask 7168
        %v367 = vsel %vm366, %v361, %v363
        %v368 = vsel %vm366, %v363, %v365
        %v371 = vsel %vm271, %v367, 0.0
        %v372 = vsel %vm272, %v368, 0.0
        %373 = vst [vmem:[#allocation2 + $0x30] sm:$0xff] %v371
        %374 = vst [vmem:[#allocation2 + $0x38] sm:$0xff] %v372
        %375 = vst [vmem:[#allocation2 + $0x40] sm:$0xff] %v287
        %376 = vst [vmem:[#allocation2 + $0x48] sm:$0xff] %v288
        %v377 = vld [vmem:[#allocation3 + $0x8] sm:$0xff]
        %v378 = vld [vmem:[#allocation3 + $0x10] sm:$0xff]
        %v379 = vld [vmem:[#allocation3 + $0x18] sm:$0xff]
        %383 = vrot.lane.b32.xlu0 %v377, 127
        %v384 = vpop.permute.xlu0 %383
        %385 = vrot.lane.b32.xlu0 %v378, 127
        %v386 = vpop.permute.xlu0 %385
        %387 = vrot.lane.b32.xlu0 %v379, 127
        %v388 = vpop.permute.xlu0 %387
        %vm389 = vcmask 1039360
        %v390 = vsel %vm389, %v384, %v386
        %v391 = vsel %vm389, %v386, %v388
        %v394 = vsel %vm273, %v390, 0.0
        %v395 = vsel %vm274, %v391, 0.0
        %396 = vst [vmem:[#allocation2 + $0x50] sm:$0xff] %v394
        %397 = vst [vmem:[#allocation2 + $0x58] sm:$0xff] %v395
        %v398 = vld [vmem:[#allocation3 + $0x8] sm:$0xff]
        %v399 = vld [vmem:[#allocation3 + $0x10] sm:$0xff]
        %v400 = vld [vmem:[#allocation3 + $0x18] sm:$0xff]
        %404 = vrot.lane.b32.xlu0 %v398, 113
        %v405 = vpop.permute.xlu0 %404
        %406 = vrot.lane.b32.xlu0 %v399, 113
        %v407 = vpop.permute.xlu0 %406
        %408 = vrot.lane.b32.xlu0 %v400, 113
        %v409 = vpop.permute.xlu0 %408
        %vm410 = vcmask 924672
        %v411 = vsel %vm410, %v405, %v407
        %v412 = vsel %vm410, %v407, %v409
        %v415 = vsel %vm283, %v411, 0.0
        %v416 = vsel %vm284, %v412, 0.0
        %417 = vst [vmem:[#allocation2 + $0x60] sm:$0xff] %v415
        %418 = vst [vmem:[#allocation2 + $0x68] sm:$0xff] %v416
        %v419 = vld [vmem:[#allocation3 + $0x8] sm:$0xff]
        %v420 = vld [vmem:[#allocation3 + $0x10] sm:$0xff]
        %v421 = vld [vmem:[#allocation3 + $0x18] sm:$0xff]
        %425 = vrot.lane.b32.xlu0 %v419, 112
        %v426 = vpop.permute.xlu0 %425
        %427 = vrot.lane.b32.xlu0 %v420, 112
        %v428 = vpop.permute.xlu0 %427
        %429 = vrot.lane.b32.xlu0 %v421, 112
        %v430 = vpop.permute.xlu0 %429
        %vm431 = vcmask 916480
        %v432 = vsel %vm431, %v426, %v428
        %v433 = vsel %vm431, %v428, %v430
        %v436 = vsel %vm277, %v432, 0.0
        %v437 = vsel %vm278, %v433, 0.0
        %438 = vst [vmem:[#allocation2 + $0x70] sm:$0xff] %v436
        %439 = vst [vmem:[#allocation2 + $0x78] sm:$0xff] %v437
        %v440 = vld [vmem:[#allocation3 + $0x8] sm:$0xff]
        %v441 = vld [vmem:[#allocation3 + $0x10] sm:$0xff]
        %v442 = vld [vmem:[#allocation3 + $0x18] sm:$0xff]
        %446 = vrot.lane.b32.xlu0 %v440, 111
        %v447 = vpop.permute.xlu0 %446
        %448 = vrot.lane.b32.xlu0 %v441, 111
        %v449 = vpop.permute.xlu0 %448
        %450 = vrot.lane.b32.xlu0 %v442, 111
        %v451 = vpop.permute.xlu0 %450
        %vm452 = vcmask 908288
        %v453 = vsel %vm452, %v447, %v449
        %v454 = vsel %vm452, %v449, %v451
        %v457 = vsel %vm285, %v453, 0.0
        %v458 = vsel %vm286, %v454, 0.0
        %459 = vst [vmem:[#allocation2 + $0x80] sm:$0xff] %v457
        %460 = vst [vmem:[#allocation2 + $0x88] sm:$0xff] %v458
        %v461 = vld [vmem:[#allocation7] sm:$0xff]
        %v462 = vld [vmem:[#allocation2] sm:$0xff]
        %v463 = vld [vmem:[#allocation2 + $0x8] sm:$0xff]
        %v464 = vld [vmem:[#allocation2 + $0x10] sm:$0xff]
        %v465 = vld [vmem:[#allocation2 + $0x18] sm:$0xff]
        %v466 = vld [vmem:[#allocation2 + $0x20] sm:$0xff]
        %v467 = vld [vmem:[#allocation2 + $0x28] sm:$0xff]
        %v468 = vld [vmem:[#allocation2 + $0x30] sm:$0xff]
        %v469 = vld [vmem:[#allocation2 + $0x38] sm:$0xff]
        %v470 = vld [vmem:[#allocation2 + $0x40] sm:$0xff]
        %v471 = vld [vmem:[#allocation2 + $0x48] sm:$0xff]
        %v472 = vld [vmem:[#allocation2 + $0x50] sm:$0xff]
        %v473 = vld [vmem:[#allocation2 + $0x58] sm:$0xff]
        %v474 = vld [vmem:[#allocation2 + $0x60] sm:$0xff]
        %v475 = vld [vmem:[#allocation2 + $0x68] sm:$0xff]
        %v476 = vld [vmem:[#allocation2 + $0x70] sm:$0xff]
        %v477 = vld [vmem:[#allocation2 + $0x78] sm:$0xff]
        %v478 = vld [vmem:[#allocation2 + $0x80] sm:$0xff]
        %v479 = vld [vmem:[#allocation2 + $0x88] sm:$0xff]
        %v480 = vld [vmem:[#allocation9] sm:$0xff]
        %482 = vset.pattern.permute.xlu0 0
        %483 = vperm.xlu0 %482, %v480
        %v484 = vpop.permute.xlu0 %483
        %vm486 = vcmask 588800
        %v488 = vsel %vm486, %v461, 0
        %490 = vmatprep.subr.mxu0 %v463
        %491 = vmatpush1.msra.mxu0 %v462
        %492 = vmatprep.subr.mxu0 %v465
        %493 = vmatpush1.msra.mxu0 %v464
        %494 = vmatprep.subr.mxu0 %v467
        %495 = vmatpush1.msra.mxu0 %v466
        %496 = vmatprep.subr.mxu0 %v469
        %497 = vmatpush1.msra.mxu0 %v468
        %498 = vmatprep.subr.mxu0 %v471
        %499 = vmatpush1.msra.mxu0 %v470
        %500 = vmatprep.subr.mxu0 %v473
        %501 = vmatpush1.msra.mxu0 %v472
        %502 = vmatprep.subr.mxu0 %v475
        %503 = vmatpush1.msra.mxu0 %v474
        %504 = vmatprep.subr.mxu0 %v477
        %505 = vmatpush1.msra.mxu0 %v476
        %506 = vmatprep.subr.mxu0 %v479
        %507 = vmatpush1.msra.mxu0 %v478
        %508 = vmatprep.subr.mxu0 0.0
        %509 = vmatpush1.msra.mxu0 0.0
        %510 = vmatprep.subr.mxu0 0.0
        %511 = vmatpush1.msra.mxu0 0.0
        %512 = vmatprep.subr.mxu0 0.0
        %513 = vmatpush1.msra.mxu0 0.0
        %514 = vmatprep.subr.mxu0 0.0
        %515 = vmatpush1.msra.mxu0 0.0
        %516 = vmatprep.subr.mxu0 0.0
        %517 = vmatpush1.msra.mxu0 0.0
        %518 = vmatprep.subr.mxu0 0.0
        %519 = vmatpush1.msra.mxu0 0.0
        %520 = vmatprep.subr.mxu0 0.0
        %521 = vmatpush1.msra.mxu0 0.0
        %522 = vmatprep.subr.mxu0 0.0
        %523 = vmatpush1.msra.mxu0 0.0
        %524 = vmatprep.subr.mxu0 0.0
        %525 = vmatpush1.msra.mxu0 0.0
        %526 = vmatprep.subr.mxu0 0.0
        %527 = vmatpush1.msra.mxu0 0.0
        %528 = vmatprep.subr.mxu0 0.0
        %529 = vmatpush1.msra.mxu0 0.0
        %530 = vmatprep.subr.mxu0 0.0
        %531 = vmatpush1.msra.mxu0 0.0
        %532 = vmatprep.subr.mxu0 0.0
        %533 = vmatpush1.msra.mxu0 0.0
        %534 = vmatprep.subr.mxu0 0.0
        %535 = vmatpush1.msra.mxu0 0.0
        %536 = vmatprep.subr.mxu0 0.0
        %537 = vmatpush1.msra.mxu0 0.0
        %538 = vmatprep.subr.mxu0 0.0
        %539 = vmatpush1.msra.mxu0 0.0
        %540 = vmatprep.subr.mxu0 0.0
        %541 = vmatpush1.msra.mxu0 0.0
        %542 = vmatprep.subr.mxu0 0.0
        %543 = vmatpush1.msra.mxu0 0.0
        %544 = vmatprep.subr.mxu0 0.0
        %545 = vmatpush1.msra.mxu0 0.0
        %546 = vmatprep.subr.mxu0 0.0
        %547 = vmatpush1.msra.mxu0 0.0
        %548 = vmatprep.subr.mxu0 0.0
        %549 = vmatpush1.msra.mxu0 0.0
        %550 = vmatprep.subr.mxu0 0.0
        %551 = vmatpush1.msra.mxu0 0.0
        %552 = vmatprep.subr.mxu0 0.0
        %553 = vmatpush1.msra.mxu0 0.0
        %554 = vmatprep.mubr.f32.mxu0 0.0
        %555 = vmatmul.mubr.f32.gmra.mrb[0].mxu0 %v488
        %v556 = vpop.f32.mrb[0].mxu0
        %v557 = vadd.f32 %v484, %v556
        %v558 = vpop.f32.mrb[0].mxu0
        %v559 = vadd.f32 %v484, %v558
        %560 = vdwg.mxu0
        %v561 = vmax.f32 %v557, 0.0
        %v562 = vmax.f32 %v559, 0.0
        %563 = vst [vmem:[#allocation3 + $0x8] sm:$0xff] %v561
        %564 = vst [vmem:[#allocation3 + $0x10] sm:$0xff] %v562
        %v565 = vld [vmem:[#allocation3] sm:$0xff]
        %v566 = vld [vmem:[#allocation3 + $0x8] sm:$0xff]
        %v567 = vld [vmem:[#allocation3 + $0x10] sm:$0xff]
        %571 = vrot.lane.b32.xlu0 %v565, 17
        %v572 = vpop.permute.xlu0 %571
        %573 = vrot.lane.b32.xlu0 %v566, 17
        %v574 = vpop.permute.xlu0 %573
        %575 = vrot.lane.b32.xlu0 %v567, 17
        %v576 = vpop.permute.xlu0 %575
        %v577 = vsel %vm303, %v572, %v574
        %v578 = vsel %vm303, %v574, %v576
        %v581 = vsel %vm279, %v577, 0.0
        %v582 = vsel %vm280, %v578, 0.0
        %583 = vst [vmem:[#allocation2 + $0x90] sm:$0xff] %v581
        %584 = vst [vmem:[#allocation2 + $0x98] sm:$0xff] %v582
        %v585 = vld [vmem:[#allocation3] sm:$0xff]
        %v586 = vld [vmem:[#allocation3 + $0x8] sm:$0xff]
        %v587 = vld [vmem:[#allocation3 + $0x10] sm:$0xff]
        %591 = vrot.lane.b32.xlu0 %v585, 16
        %v592 = vpop.permute.xlu0 %591
        %593 = vrot.lane.b32.xlu0 %v586, 16
        %v594 = vpop.permute.xlu0 %593
        %595 = vrot.lane.b32.xlu0 %v587, 16
        %v596 = vpop.permute.xlu0 %595
        %v597 = vsel %vm324, %v592, %v594
        %v598 = vsel %vm324, %v594, %v596
        %v601 = vsel %vm275, %v597, 0.0
        %v602 = vsel %vm276, %v598, 0.0
        %603 = vst [vmem:[#allocation2 + $0xa0] sm:$0xff] %v601
        %604 = vst [vmem:[#allocation2 + $0xa8] sm:$0xff] %v602
        %v605 = vld [vmem:[#allocation3] sm:$0xff]
        %v606 = vld [vmem:[#allocation3 + $0x8] sm:$0xff]
        %v607 = vld [vmem:[#allocation3 + $0x10] sm:$0xff]
        %611 = vrot.lane.b32.xlu0 %v605, 15
        %v612 = vpop.permute.xlu0 %611
        %613 = vrot.lane.b32.xlu0 %v606, 15
        %v614 = vpop.permute.xlu0 %613
        %615 = vrot.lane.b32.xlu0 %v607, 15
        %v616 = vpop.permute.xlu0 %615
        %v617 = vsel %vm345, %v612, %v614
        %v618 = vsel %vm345, %v614, %v616
        %v621 = vsel %vm281, %v617, 0.0
        %v622 = vsel %vm282, %v618, 0.0
        %623 = vst [vmem:[#allocation2 + $0xb0] sm:$0xff] %v621
        %624 = vst [vmem:[#allocation2 + $0xb8] sm:$0xff] %v622
        %v625 = vld [vmem:[#allocation3] sm:$0xff]
        %v626 = vld [vmem:[#allocation3 + $0x8] sm:$0xff]
        %v627 = vld [vmem:[#allocation3 + $0x10] sm:$0xff]
        %631 = vrot.lane.b32.xlu0 %v625, 1
        %v632 = vpop.permute.xlu0 %631
        %633 = vrot.lane.b32.xlu0 %v626, 1
        %v634 = vpop.permute.xlu0 %633
        %635 = vrot.lane.b32.xlu0 %v627, 1
        %v636 = vpop.permute.xlu0 %635
        %v637 = vsel %vm366, %v632, %v634
        %v638 = vsel %vm366, %v634, %v636
        %v641 = vsel %vm271, %v637, 0.0
        %v642 = vsel %vm272, %v638, 0.0
        %643 = vst [vmem:[#allocation2 + $0xc0] sm:$0xff] %v641
        %644 = vst [vmem:[#allocation2 + $0xc8] sm:$0xff] %v642
        %645 = vst [vmem:[#allocation2 + $0xd0] sm:$0xff] %v561
        %646 = vst [vmem:[#allocation2 + $0xd8] sm:$0xff] %v562
        %v647 = vld [vmem:[#allocation3 + $0x8] sm:$0xff]
        %v648 = vld [vmem:[#allocation3 + $0x10] sm:$0xff]
        %v649 = vld [vmem:[#allocation3 + $0x18] sm:$0xff]
        %653 = vrot.lane.b32.xlu0 %v647, 127
        %v654 = vpop.permute.xlu0 %653
        %655 = vrot.lane.b32.xlu0 %v648, 127
        %v656 = vpop.permute.xlu0 %655
        %657 = vrot.lane.b32.xlu0 %v649, 127
        %v658 = vpop.permute.xlu0 %657
        %v659 = vsel %vm389, %v654, %v656
        %v660 = vsel %vm389, %v656, %v658
        %v663 = vsel %vm273, %v659, 0.0
        %v664 = vsel %vm274, %v660, 0.0
        %665 = vst [vmem:[#allocation2 + $0xe0] sm:$0xff] %v663
        %666 = vst [vmem:[#allocation2 + $0xe8] sm:$0xff] %v664
        %v667 = vld [vmem:[#allocation3 + $0x8] sm:$0xff]
        %v668 = vld [vmem:[#allocation3 + $0x10] sm:$0xff]
        %v669 = vld [vmem:[#allocation3 + $0x18] sm:$0xff]
        %673 = vrot.lane.b32.xlu0 %v667, 113
        %v674 = vpop.permute.xlu0 %673
        %675 = vrot.lane.b32.xlu0 %v668, 113
        %v676 = vpop.permute.xlu0 %675
        %677 = vrot.lane.b32.xlu0 %v669, 113
        %v678 = vpop.permute.xlu0 %677
        %v679 = vsel %vm410, %v674, %v676
        %v680 = vsel %vm410, %v676, %v678
        %v683 = vsel %vm283, %v679, 0.0
        %v684 = vsel %vm284, %v680, 0.0
        %685 = vst [vmem:[#allocation2 + $0xf0] sm:$0xff] %v683
        %686 = vst [vmem:[#allocation2 + $0xf8] sm:$0xff] %v684
        %v687 = vld [vmem:[#allocation3 + $0x8] sm:$0xff]
        %v688 = vld [vmem:[#allocation3 + $0x10] sm:$0xff]
        %v689 = vld [vmem:[#allocation3 + $0x18] sm:$0xff]
        %693 = vrot.lane.b32.xlu0 %v687, 112
        %v694 = vpop.permute.xlu0 %693
        %695 = vrot.lane.b32.xlu0 %v688, 112
        %v696 = vpop.permute.xlu0 %695
        %697 = vrot.lane.b32.xlu0 %v689, 112
        %v698 = vpop.permute.xlu0 %697
        %v699 = vsel %vm431, %v694, %v696
        %v700 = vsel %vm431, %v696, %v698
        %v703 = vsel %vm277, %v699, 0.0
        %v704 = vsel %vm278, %v700, 0.0
        %705 = vst [vmem:[#allocation2 + $0x100] sm:$0xff] %v703
        %706 = vst [vmem:[#allocation2 + $0x108] sm:$0xff] %v704
        %v707 = vld [vmem:[#allocation3 + $0x8] sm:$0xff]
        %v708 = vld [vmem:[#allocation3 + $0x10] sm:$0xff]
        %v709 = vld [vmem:[#allocation3 + $0x18] sm:$0xff]
        %713 = vrot.lane.b32.xlu0 %v707, 111
        %v714 = vpop.permute.xlu0 %713
        %715 = vrot.lane.b32.xlu0 %v708, 111
        %v716 = vpop.permute.xlu0 %715
        %717 = vrot.lane.b32.xlu0 %v709, 111
        %v718 = vpop.permute.xlu0 %717
        %v719 = vsel %vm452, %v714, %v716
        %v720 = vsel %vm452, %v716, %v718
        %v723 = vsel %vm285, %v719, 0.0
        %v724 = vsel %vm286, %v720, 0.0
        %725 = vst [vmem:[#allocation2 + $0x110] sm:$0xff] %v723
        %726 = vst [vmem:[#allocation2 + $0x118] sm:$0xff] %v724
        %v727 = vld [vmem:[#allocation7] sm:$0xff]
        %v728 = vld [vmem:[#allocation7 + $0x8] sm:$0xff]
        %v729 = vld [vmem:[#allocation2] sm:$0xff]
        %v730 = vld [vmem:[#allocation2 + $0x8] sm:$0xff]
        %v731 = vld [vmem:[#allocation2 + $0x10] sm:$0xff]
        %v732 = vld [vmem:[#allocation2 + $0x18] sm:$0xff]
        %v733 = vld [vmem:[#allocation2 + $0x20] sm:$0xff]
        %v734 = vld [vmem:[#allocation2 + $0x28] sm:$0xff]
        %v735 = vld [vmem:[#allocation2 + $0x30] sm:$0xff]
        %v736 = vld [vmem:[#allocation2 + $0x38] sm:$0xff]
        %v737 = vld [vmem:[#allocation2 + $0x40] sm:$0xff]
        %v738 = vld [vmem:[#allocation2 + $0x48] sm:$0xff]
        %v739 = vld [vmem:[#allocation2 + $0x50] sm:$0xff]
        %v740 = vld [vmem:[#allocation2 + $0x58] sm:$0xff]
        %v741 = vld [vmem:[#allocation2 + $0x60] sm:$0xff]
        %v742 = vld [vmem:[#allocation2 + $0x68] sm:$0xff]
        %v743 = vld [vmem:[#allocation2 + $0x70] sm:$0xff]
        %v744 = vld [vmem:[#allocation2 + $0x78] sm:$0xff]
        %v745 = vld [vmem:[#allocation2 + $0x80] sm:$0xff]
        %v746 = vld [vmem:[#allocation2 + $0x88] sm:$0xff]
        %v747 = vld [vmem:[#allocation2 + $0x90] sm:$0xff]
        %v748 = vld [vmem:[#allocation2 + $0x98] sm:$0xff]
        %v749 = vld [vmem:[#allocation2 + $0xa0] sm:$0xff]
        %v750 = vld [vmem:[#allocation2 + $0xa8] sm:$0xff]
        %v751 = vld [vmem:[#allocation2 + $0xb0] sm:$0xff]
        %v752 = vld [vmem:[#allocation2 + $0xb8] sm:$0xff]
        %v753 = vld [vmem:[#allocation2 + $0xc0] sm:$0xff]
        %v754 = vld [vmem:[#allocation2 + $0xc8] sm:$0xff]
        %v755 = vld [vmem:[#allocation2 + $0xd0] sm:$0xff]
        %v756 = vld [vmem:[#allocation2 + $0xd8] sm:$0xff]
        %v757 = vld [vmem:[#allocation2 + $0xe0] sm:$0xff]
        %v758 = vld [vmem:[#allocation2 + $0xe8] sm:$0xff]
        %v759 = vld [vmem:[#allocation2 + $0xf0] sm:$0xff]
        %v760 = vld [vmem:[#allocation2 + $0xf8] sm:$0xff]
        %v761 = vld [vmem:[#allocation2 + $0x100] sm:$0xff]
        %v762 = vld [vmem:[#allocation2 + $0x108] sm:$0xff]
        %v763 = vld [vmem:[#allocation2 + $0x110] sm:$0xff]
        %v764 = vld [vmem:[#allocation2 + $0x118] sm:$0xff]
        %v765 = vld [vmem:[#allocation9] sm:$0xff]
        %767 = vset.pattern.permute.xlu0 1
        %768 = vperm.xlu0 %767, %v765
        %v769 = vpop.permute.xlu0 %768
        %773 = vrot.lane.b32.xlu0 %v727, 56
        %v774 = vpop.permute.xlu0 %773
        %775 = vrot.lane.b32.xlu0 %v728, 56
        %v776 = vpop.permute.xlu0 %775
        %vm777 = vcmask 457728
        %v778 = vsel %vm777, %v774, %v776
        %v780 = vsel %vm324, %v776, 0
        %782 = vmatprep.subr.mxu0 %v730
        %783 = vmatpush1.msra.mxu0 %v729
        %784 = vmatprep.subr.mxu0 %v732
        %785 = vmatpush1.msra.mxu0 %v731
        %786 = vmatprep.subr.mxu0 %v734
        %787 = vmatpush1.msra.mxu0 %v733
        %788 = vmatprep.subr.mxu0 %v736
        %789 = vmatpush1.msra.mxu0 %v735
        %790 = vmatprep.subr.mxu0 %v738
        %791 = vmatpush1.msra.mxu0 %v737
        %792 = vmatprep.subr.mxu0 %v740
        %793 = vmatpush1.msra.mxu0 %v739
        %794 = vmatprep.subr.mxu0 %v742
        %795 = vmatpush1.msra.mxu0 %v741
        %796 = vmatprep.subr.mxu0 %v744
        %797 = vmatpush1.msra.mxu0 %v743
        %798 = vmatprep.subr.mxu0 %v746
        %799 = vmatpush1.msra.mxu0 %v745
        %800 = vmatprep.subr.mxu0 %v748
        %801 = vmatpush1.msra.mxu0 %v747
        %802 = vmatprep.subr.mxu0 %v750
        %803 = vmatpush1.msra.mxu0 %v749
        %804 = vmatprep.subr.mxu0 %v752
        %805 = vmatpush1.msra.mxu0 %v751
        %806 = vmatprep.subr.mxu0 %v754
        %807 = vmatpush1.msra.mxu0 %v753
        %808 = vmatprep.subr.mxu0 %v756
        %809 = vmatpush1.msra.mxu0 %v755
        %810 = vmatprep.subr.mxu0 %v758
        %811 = vmatpush1.msra.mxu0 %v757
        %812 = vmatprep.subr.mxu0 %v760
        %813 = vmatpush1.msra.mxu0 %v759
        %814 = vmatprep.subr.mxu0 %v762
        %815 = vmatpush1.msra.mxu0 %v761
        %816 = vmatprep.subr.mxu0 %v764
        %817 = vmatpush1.msra.mxu0 %v763
        %818 = vmatprep.subr.mxu0 0.0
        %819 = vmatpush1.msra.mxu0 0.0
        %820 = vmatprep.subr.mxu0 0.0
        %821 = vmatpush1.msra.mxu0 0.0
        %822 = vmatprep.subr.mxu0 0.0
        %823 = vmatpush1.msra.mxu0 0.0
        %824 = vmatprep.subr.mxu0 0.0
        %825 = vmatpush1.msra.mxu0 0.0
        %826 = vmatprep.subr.mxu0 0.0
        %827 = vmatpush1.msra.mxu0 0.0
        %828 = vmatprep.subr.mxu0 0.0
        %829 = vmatpush1.msra.mxu0 0.0
        %830 = vmatprep.subr.mxu0 0.0
        %831 = vmatpush1.msra.mxu0 0.0
        %832 = vmatprep.subr.mxu0 0.0
        %833 = vmatpush1.msra.mxu0 0.0
        %834 = vmatprep.subr.mxu0 0.0
        %835 = vmatpush1.msra.mxu0 0.0
        %836 = vmatprep.subr.mxu0 0.0
        %837 = vmatpush1.msra.mxu0 0.0
        %838 = vmatprep.subr.mxu0 0.0
        %839 = vmatpush1.msra.mxu0 0.0
        %840 = vmatprep.subr.mxu0 0.0
        %841 = vmatpush1.msra.mxu0 0.0
        %842 = vmatprep.subr.mxu0 0.0
        %843 = vmatpush1.msra.mxu0 0.0
        %844 = vmatprep.subr.mxu0 0.0
        %845 = vmatpush1.msra.mxu0 0.0
        %846 = vmatprep.mubr.f32.mxu0 %v780
        %847 = vmatmul.mubr.f32.gmra.mrb[0].mxu0 %v778
        %v848 = vpop.f32.mrb[0].mxu0
        %v849 = vadd.f32 %v769, %v848
        %v850 = vpop.f32.mrb[0].mxu0
        %v851 = vadd.f32 %v769, %v850
        %852 = vdwg.mxu0
        %v853 = vmax.f32 %v849, 0.0
        %v854 = vmax.f32 %v851, 0.0
        %855 = vst [vmem:[#allocation3 + $0x8] sm:$0xff] %v853
        %856 = vst [vmem:[#allocation3 + $0x10] sm:$0xff] %v854
        %v857 = vld [vmem:[#allocation3] sm:$0xff]
        %v858 = vld [vmem:[#allocation3 + $0x8] sm:$0xff]
        %v859 = vld [vmem:[#allocation3 + $0x10] sm:$0xff]
        %863 = vrot.lane.b32.xlu0 %v857, 17
        %v864 = vpop.permute.xlu0 %863
        %865 = vrot.lane.b32.xlu0 %v858, 17
        %v866 = vpop.permute.xlu0 %865
        %867 = vrot.lane.b32.xlu0 %v859, 17
        %v868 = vpop.permute.xlu0 %867
        %v869 = vsel %vm303, %v864, %v866
        %v870 = vsel %vm303, %v866, %v868
        %v873 = vsel %vm279, %v869, 0.0
        %v874 = vsel %vm280, %v870, 0.0
        %875 = vst [vmem:[#allocation2 + $0x120] sm:$0xff] %v873
        %876 = vst [vmem:[#allocation2 + $0x128] sm:$0xff] %v874
        %v877 = vld [vmem:[#allocation3] sm:$0xff]
        %v878 = vld [vmem:[#allocation3 + $0x8] sm:$0xff]
        %v879 = vld [vmem:[#allocation3 + $0x10] sm:$0xff]
        %883 = vrot.lane.b32.xlu0 %v877, 16
        %v884 = vpop.permute.xlu0 %883
        %885 = vrot.lane.b32.xlu0 %v878, 16
        %v886 = vpop.permute.xlu0 %885
        %887 = vrot.lane.b32.xlu0 %v879, 16
        %v888 = vpop.permute.xlu0 %887
        %v889 = vsel %vm324, %v884, %v886
        %v890 = vsel %vm324, %v886, %v888
        %v893 = vsel %vm275, %v889, 0.0
        %v894 = vsel %vm276, %v890, 0.0
        %895 = vst [vmem:[#allocation2 + $0x130] sm:$0xff] %v893
        %896 = vst [vmem:[#allocation2 + $0x138] sm:$0xff] %v894
        %v897 = vld [vmem:[#allocation3] sm:$0xff]
        %v898 = vld [vmem:[#allocation3 + $0x8] sm:$0xff]
        %v899 = vld [vmem:[#allocation3 + $0x10] sm:$0xff]
        %903 = vrot.lane.b32.xlu0 %v897, 15
        %v904 = vpop.permute.xlu0 %903
        %905 = vrot.lane.b32.xlu0 %v898, 15
        %v906 = vpop.permute.xlu0 %905
        %907 = vrot.lane.b32.xlu0 %v899, 15
        %v908 = vpop.permute.xlu0 %907
        %v909 = vsel %vm345, %v904, %v906
        %v910 = vsel %vm345, %v906, %v908
        %v913 = vsel %vm281, %v909, 0.0
        %v914 = vsel %vm282, %v910, 0.0
        %915 = vst [vmem:[#allocation2 + $0x140] sm:$0xff] %v913
        %916 = vst [vmem:[#allocation2 + $0x148] sm:$0xff] %v914
        %v917 = vld [vmem:[#allocation3] sm:$0xff]
        %v918 = vld [vmem:[#allocation3 + $0x8] sm:$0xff]
        %v919 = vld [vmem:[#allocation3 + $0x10] sm:$0xff]
        %923 = vrot.lane.b32.xlu0 %v917, 1
        %v924 = vpop.permute.xlu0 %923
        %925 = vrot.lane.b32.xlu0 %v918, 1
        %v926 = vpop.permute.xlu0 %925
        %927 = vrot.lane.b32.xlu0 %v919, 1
        %v928 = vpop.permute.xlu0 %927
        %v929 = vsel %vm366, %v924, %v926
        %v930 = vsel %vm366, %v926, %v928
        %v933 = vsel %vm271, %v929, 0.0
        %v934 = vsel %vm272, %v930, 0.0
        %935 = vst [vmem:[#allocation2 + $0x150] sm:$0xff] %v933
        %936 = vst [vmem:[#allocation2 + $0x158] sm:$0xff] %v934
        %937 = vst [vmem:[#allocation2 + $0x160] sm:$0xff] %v853
        %938 = vst [vmem:[#allocation2 + $0x168] sm:$0xff] %v854
        %v939 = vld [vmem:[#allocation3 + $0x8] sm:$0xff]
        %v940 = vld [vmem:[#allocation3 + $0x10] sm:$0xff]
        %v941 = vld [vmem:[#allocation3 + $0x18] sm:$0xff]
        %945 = vrot.lane.b32.xlu0 %v939, 127
        %v946 = vpop.permute.xlu0 %945
        %947 = vrot.lane.b32.xlu0 %v940, 127
        %v948 = vpop.permute.xlu0 %947
        %949 = vrot.lane.b32.xlu0 %v941, 127
        %v950 = vpop.permute.xlu0 %949
        %v951 = vsel %vm389, %v946, %v948
        %v952 = vsel %vm389, %v948, %v950
        %v955 = vsel %vm273, %v951, 0.0
        %v956 = vsel %vm274, %v952, 0.0
        %957 = vst [vmem:[#allocation2 + $0x170] sm:$0xff] %v955
        %958 = vst [vmem:[#allocation2 + $0x178] sm:$0xff] %v956
        %v959 = vld [vmem:[#allocation3 + $0x8] sm:$0xff]
        %v960 = vld [vmem:[#allocation3 + $0x10] sm:$0xff]
        %v961 = vld [vmem:[#allocation3 + $0x18] sm:$0xff]
        %965 = vrot.lane.b32.xlu0 %v959, 113
        %v966 = vpop.permute.xlu0 %965
        %967 = vrot.lane.b32.xlu0 %v960, 113
        %v968 = vpop.permute.xlu0 %967
        %969 = vrot.lane.b32.xlu0 %v961, 113
        %v970 = vpop.permute.xlu0 %969
        %v971 = vsel %vm410, %v966, %v968
        %v972 = vsel %vm410, %v968, %v970
        %v975 = vsel %vm283, %v971, 0.0
        %v976 = vsel %vm284, %v972, 0.0
        %977 = vst [vmem:[#allocation2 + $0x180] sm:$0xff] %v975
        %978 = vst [vmem:[#allocation2 + $0x188] sm:$0xff] %v976
        %v979 = vld [vmem:[#allocation3 + $0x8] sm:$0xff]
        %v980 = vld [vmem:[#allocation3 + $0x10] sm:$0xff]
        %v981 = vld [vmem:[#allocation3 + $0x18] sm:$0xff]
        %985 = vrot.lane.b32.xlu0 %v979, 112
        %v986 = vpop.permute.xlu0 %985
        %987 = vrot.lane.b32.xlu0 %v980, 112
        %v988 = vpop.permute.xlu0 %987
        %989 = vrot.lane.b32.xlu0 %v981, 112
        %v990 = vpop.permute.xlu0 %989
        %v991 = vsel %vm431, %v986, %v988
        %v992 = vsel %vm431, %v988, %v990
        %v995 = vsel %vm277, %v991, 0.0
        %v996 = vsel %vm278, %v992, 0.0
        %997 = vst [vmem:[#allocation2 + $0x190] sm:$0xff] %v995
        %998 = vst [vmem:[#allocation2 + $0x198] sm:$0xff] %v996
        %v999 = vld [vmem:[#allocation3 + $0x8] sm:$0xff]
        %v1000 = vld [vmem:[#allocation3 + $0x10] sm:$0xff]
        %v1001 = vld [vmem:[#allocation3 + $0x18] sm:$0xff]
        %1005 = vrot.lane.b32.xlu0 %v999, 111
        %v1006 = vpop.permute.xlu0 %1005
        %1007 = vrot.lane.b32.xlu0 %v1000, 111
        %v1008 = vpop.permute.xlu0 %1007
        %1009 = vrot.lane.b32.xlu0 %v1001, 111
        %v1010 = vpop.permute.xlu0 %1009
        %v1011 = vsel %vm452, %v1006, %v1008
        %v1012 = vsel %vm452, %v1008, %v1010
        %v1015 = vsel %vm285, %v1011, 0.0
        %v1016 = vsel %vm286, %v1012, 0.0
        %1017 = vst [vmem:[#allocation2 + $0x1a0] sm:$0xff] %v1015
        %1018 = vst [vmem:[#allocation2 + $0x1a8] sm:$0xff] %v1016
        %v1019 = vld [vmem:[#allocation7 + $0x8] sm:$0xff]
        %v1020 = vld [vmem:[#allocation7 + $0x10] sm:$0xff]
        %v1021 = vld [vmem:[#allocation7 + $0x18] sm:$0xff]
        %v1022 = vld [vmem:[#allocation2] sm:$0xff]
        %v1023 = vld [vmem:[#allocation2 + $0x8] sm:$0xff]
        %v1024 = vld [vmem:[#allocation2 + $0x10] sm:$0xff]
        %v1025 = vld [vmem:[#allocation2 + $0x18] sm:$0xff]
        %v1026 = vld [vmem:[#allocation2 + $0x20] sm:$0xff]
        %v1027 = vld [vmem:[#allocation2 + $0x28] sm:$0xff]
        %v1028 = vld [vmem:[#allocation2 + $0x30] sm:$0xff]
        %v1029 = vld [vmem:[#allocation2 + $0x38] sm:$0xff]
        %v1030 = vld [vmem:[#allocation2 + $0x40] sm:$0xff]
        %v1031 = vld [vmem:[#allocation2 + $0x48] sm:$0xff]
        %v1032 = vld [vmem:[#allocation2 + $0x50] sm:$0xff]
        %v1033 = vld [vmem:[#allocation2 + $0x58] sm:$0xff]
        %v1034 = vld [vmem:[#allocation2 + $0x60] sm:$0xff]
        %v1035 = vld [vmem:[#allocation2 + $0x68] sm:$0xff]
        %v1036 = vld [vmem:[#allocation2 + $0x70] sm:$0xff]
        %v1037 = vld [vmem:[#allocation2 + $0x78] sm:$0xff]
        %v1038 = vld [vmem:[#allocation2 + $0x80] sm:$0xff]
        %v1039 = vld [vmem:[#allocation2 + $0x88] sm:$0xff]
        %v1040 = vld [vmem:[#allocation2 + $0x90] sm:$0xff]
        %v1041 = vld [vmem:[#allocation2 + $0x98] sm:$0xff]
        %v1042 = vld [vmem:[#allocation2 + $0xa0] sm:$0xff]
        %v1043 = vld [vmem:[#allocation2 + $0xa8] sm:$0xff]
        %v1044 = vld [vmem:[#allocation2 + $0xb0] sm:$0xff]
        %v1045 = vld [vmem:[#allocation2 + $0xb8] sm:$0xff]
        %v1046 = vld [vmem:[#allocation2 + $0xc0] sm:$0xff]
        %v1047 = vld [vmem:[#allocation2 + $0xc8] sm:$0xff]
        %v1048 = vld [vmem:[#allocation2 + $0xd0] sm:$0xff]
        %v1049 = vld [vmem:[#allocation2 + $0xd8] sm:$0xff]
        %v1050 = vld [vmem:[#allocation2 + $0xe0] sm:$0xff]
        %v1051 = vld [vmem:[#allocation2 + $0xe8] sm:$0xff]
        %v1052 = vld [vmem:[#allocation2 + $0xf0] sm:$0xff]
        %v1053 = vld [vmem:[#allocation2 + $0xf8] sm:$0xff]
        %v1054 = vld [vmem:[#allocation2 + $0x100] sm:$0xff]
        %v1055 = vld [vmem:[#allocation2 + $0x108] sm:$0xff]
        %v1056 = vld [vmem:[#allocation2 + $0x110] sm:$0xff]
        %v1057 = vld [vmem:[#allocation2 + $0x118] sm:$0xff]
        %v1058 = vld [vmem:[#allocation2 + $0x120] sm:$0xff]
        %v1059 = vld [vmem:[#allocation2 + $0x128] sm:$0xff]
        %v1060 = vld [vmem:[#allocation2 + $0x130] sm:$0xff]
        %v1061 = vld [vmem:[#allocation2 + $0x138] sm:$0xff]
        %v1062 = vld [vmem:[#allocation2 + $0x140] sm:$0xff]
        %v1063 = vld [vmem:[#allocation2 + $0x148] sm:$0xff]
        %v1064 = vld [vmem:[#allocation2 + $0x150] sm:$0xff]
        %v1065 = vld [vmem:[#allocation2 + $0x158] sm:$0xff]
        %v1066 = vld [vmem:[#allocation2 + $0x160] sm:$0xff]
        %v1067 = vld [vmem:[#allocation2 + $0x168] sm:$0xff]
        %v1068 = vld [vmem:[#allocation2 + $0x170] sm:$0xff]
        %v1069 = vld [vmem:[#allocation2 + $0x178] sm:$0xff]
        %v1070 = vld [vmem:[#allocation2 + $0x180] sm:$0xff]
        %v1071 = vld [vmem:[#allocation2 + $0x188] sm:$0xff]
        %v1072 = vld [vmem:[#allocation2 + $0x190] sm:$0xff]
        %v1073 = vld [vmem:[#allocation2 + $0x198] sm:$0xff]
        %v1074 = vld [vmem:[#allocation2 + $0x1a0] sm:$0xff]
        %v1075 = vld [vmem:[#allocation2 + $0x1a8] sm:$0xff]
        %v1076 = vld [vmem:[#allocation9] sm:$0xff]
        %1078 = vset.pattern.permute.xlu0 2
        %1079 = vperm.xlu0 %1078, %v1076
        %v1080 = vpop.permute.xlu0 %1079
        %1085 = vrot.lane.b32.xlu0 %v1019, 40
        %v1086 = vpop.permute.xlu0 %1085
        %1087 = vrot.lane.b32.xlu0 %v1020, 40
        %v1088 = vpop.permute.xlu0 %1087
        %1089 = vrot.lane.b32.xlu0 %v1021, 40
        %v1090 = vpop.permute.xlu0 %1089
        %vm1091 = vcmask 326656
        %v1092 = vsel %vm1091, %v1086, %v1088
        %v1093 = vsel %vm1091, %v1088, %v1090
        %vm1095 = vcmask 719872
        %v1096 = vsel %vm1095, %v1093, 0
        %1098 = vmatprep.subr.mxu0 %v1023
        %1099 = vmatpush1.msra.mxu0 %v1022
        %1100 = vmatprep.subr.mxu0 %v1025
        %1101 = vmatpush1.msra.mxu0 %v1024
        %1102 = vmatprep.subr.mxu0 %v1027
        %1103 = vmatpush1.msra.mxu0 %v1026
        %1104 = vmatprep.subr.mxu0 %v1029
        %1105 = vmatpush1.msra.mxu0 %v1028
        %1106 = vmatprep.subr.mxu0 %v1031
        %1107 = vmatpush1.msra.mxu0 %v1030
        %1108 = vmatprep.subr.mxu0 %v1033
        %1109 = vmatpush1.msra.mxu0 %v1032
        %1110 = vmatprep.subr.mxu0 %v1035
        %1111 = vmatpush1.msra.mxu0 %v1034
        %1112 = vmatprep.subr.mxu0 %v1037
        %1113 = vmatpush1.msra.mxu0 %v1036
        %1114 = vmatprep.subr.mxu0 %v1039
        %1115 = vmatpush1.msra.mxu0 %v1038
        %1116 = vmatprep.subr.mxu0 %v1041
        %1117 = vmatpush1.msra.mxu0 %v1040
        %1118 = vmatprep.subr.mxu0 %v1043
        %1119 = vmatpush1.msra.mxu0 %v1042
        %1120 = vmatprep.subr.mxu0 %v1045
        %1121 = vmatpush1.msra.mxu0 %v1044
        %1122 = vmatprep.subr.mxu0 %v1047
        %1123 = vmatpush1.msra.mxu0 %v1046
        %1124 = vmatprep.subr.mxu0 %v1049
        %1125 = vmatpush1.msra.mxu0 %v1048
        %1126 = vmatprep.subr.mxu0 %v1051
        %1127 = vmatpush1.msra.mxu0 %v1050
        %1128 = vmatprep.subr.mxu0 %v1053
        %1129 = vmatpush1.msra.mxu0 %v1052
        %1130 = vmatprep.subr.mxu0 %v1055
        %1131 = vmatpush1.msra.mxu0 %v1054
        %1132 = vmatprep.subr.mxu0 %v1057
        %1133 = vmatpush1.msra.mxu0 %v1056
        %1134 = vmatprep.subr.mxu0 %v1059
        %1135 = vmatpush1.msra.mxu0 %v1058
        %1136 = vmatprep.subr.mxu0 %v1061
        %1137 = vmatpush1.msra.mxu0 %v1060
        %1138 = vmatprep.subr.mxu0 %v1063
        %1139 = vmatpush1.msra.mxu0 %v1062
        %1140 = vmatprep.subr.mxu0 %v1065
        %1141 = vmatpush1.msra.mxu0 %v1064
        %1142 = vmatprep.subr.mxu0 %v1067
        %1143 = vmatpush1.msra.mxu0 %v1066
        %1144 = vmatprep.subr.mxu0 %v1069
        %1145 = vmatpush1.msra.mxu0 %v1068
        %1146 = vmatprep.subr.mxu0 %v1071
        %1147 = vmatpush1.msra.mxu0 %v1070
        %1148 = vmatprep.subr.mxu0 %v1073
        %1149 = vmatpush1.msra.mxu0 %v1072
        %1150 = vmatprep.subr.mxu0 %v1075
        %1151 = vmatpush1.msra.mxu0 %v1074
        %1152 = vmatprep.subr.mxu0 0.0
        %1153 = vmatpush1.msra.mxu0 0.0
        %1154 = vmatprep.subr.mxu0 0.0
        %1155 = vmatpush1.msra.mxu0 0.0
        %1156 = vmatprep.subr.mxu0 0.0
        %1157 = vmatpush1.msra.mxu0 0.0
        %1158 = vmatprep.subr.mxu0 0.0
        %1159 = vmatpush1.msra.mxu0 0.0
        %1160 = vmatprep.subr.mxu0 0.0
        %1161 = vmatpush1.msra.mxu0 0.0
        %1162 = vmatprep.mubr.f32.mxu0 %v1096
        %1163 = vmatmul.mubr.f32.gmra.mrb[0].mxu0 %v1092
        %v1164 = vpop.f32.mrb[0].mxu0
        %v1165 = vadd.f32 %v1080, %v1164
        %v1166 = vpop.f32.mrb[0].mxu0
        %v1167 = vadd.f32 %v1080, %v1166
        %1168 = vdwg.mxu0
        %v1169 = vmax.f32 %v1165, 0.0
        %v1170 = vmax.f32 %v1167, 0.0
        %1171 = vst [vmem:[#allocation3 + $0x8] sm:$0xff] %v1169
        %1172 = vst [vmem:[#allocation3 + $0x10] sm:$0xff] %v1170
        %v1173 = vld [vmem:[#allocation3] sm:$0xff]
        %v1174 = vld [vmem:[#allocation3 + $0x8] sm:$0xff]
        %v1175 = vld [vmem:[#allocation3 + $0x10] sm:$0xff]
        %1179 = vrot.lane.b32.xlu0 %v1173, 17
        %v1180 = vpop.permute.xlu0 %1179
        %1181 = vrot.lane.b32.xlu0 %v1174, 17
        %v1182 = vpop.permute.xlu0 %1181
        %1183 = vrot.lane.b32.xlu0 %v1175, 17
        %v1184 = vpop.permute.xlu0 %1183
        %v1185 = vsel %vm303, %v1180, %v1182
        %v1186 = vsel %vm303, %v1182, %v1184
        %v1189 = vsel %vm279, %v1185, 0.0
        %v1190 = vsel %vm280, %v1186, 0.0
        %1191 = vst [vmem:[#allocation2 + $0x1b0] sm:$0xff] %v1189
        %1192 = vst [vmem:[#allocation2 + $0x1b8] sm:$0xff] %v1190
        %v1193 = vld [vmem:[#allocation3] sm:$0xff]
        %v1194 = vld [vmem:[#allocation3 + $0x8] sm:$0xff]
        %v1195 = vld [vmem:[#allocation3 + $0x10] sm:$0xff]
        %1199 = vrot.lane.b32.xlu0 %v1193, 16
        %v1200 = vpop.permute.xlu0 %1199
        %1201 = vrot.lane.b32.xlu0 %v1194, 16
        %v1202 = vpop.permute.xlu0 %1201
        %1203 = vrot.lane.b32.xlu0 %v1195, 16
        %v1204 = vpop.permute.xlu0 %1203
        %v1205 = vsel %vm324, %v1200, %v1202
        %v1206 = vsel %vm324, %v1202, %v1204
        %v1209 = vsel %vm275, %v1205, 0.0
        %v1210 = vsel %vm276, %v1206, 0.0
        %1211 = vst [vmem:[#allocation2 + $0x1c0] sm:$0xff] %v1209
        %1212 = vst [vmem:[#allocation2 + $0x1c8] sm:$0xff] %v1210
        %v1213 = vld [vmem:[#allocation3] sm:$0xff]
        %v1214 = vld [vmem:[#allocation3 + $0x8] sm:$0xff]
        %v1215 = vld [vmem:[#allocation3 + $0x10] sm:$0xff]
        %1219 = vrot.lane.b32.xlu0 %v1213, 15
        %v1220 = vpop.permute.xlu0 %1219
        %1221 = vrot.lane.b32.xlu0 %v1214, 15
        %v1222 = vpop.permute.xlu0 %1221
        %1223 = vrot.lane.b32.xlu0 %v1215, 15
        %v1224 = vpop.permute.xlu0 %1223
        %v1225 = vsel %vm345, %v1220, %v1222
        %v1226 = vsel %vm345, %v1222, %v1224
        %v1229 = vsel %vm281, %v1225, 0.0
        %v1230 = vsel %vm282, %v1226, 0.0
        %1231 = vst [vmem:[#allocation2 + $0x1d0] sm:$0xff] %v1229
        %1232 = vst [vmem:[#allocation2 + $0x1d8] sm:$0xff] %v1230
        %v1233 = vld [vmem:[#allocation3] sm:$0xff]
        %v1234 = vld [vmem:[#allocation3 + $0x8] sm:$0xff]
        %v1235 = vld [vmem:[#allocation3 + $0x10] sm:$0xff]
        %1239 = vrot.lane.b32.xlu0 %v1233, 1
        %v1240 = vpop.permute.xlu0 %1239
        %1241 = vrot.lane.b32.xlu0 %v1234, 1
        %v1242 = vpop.permute.xlu0 %1241
        %1243 = vrot.lane.b32.xlu0 %v1235, 1
        %v1244 = vpop.permute.xlu0 %1243
        %v1245 = vsel %vm366, %v1240, %v1242
        %v1246 = vsel %vm366, %v1242, %v1244
        %v1249 = vsel %vm271, %v1245, 0.0
        %v1250 = vsel %vm272, %v1246, 0.0
        %1251 = vst [vmem:[#allocation2 + $0x1e0] sm:$0xff] %v1249
        %1252 = vst [vmem:[#allocation2 + $0x1e8] sm:$0xff] %v1250
        %1253 = vst [vmem:[#allocation2 + $0x1f0] sm:$0xff] %v1169
        %1254 = vst [vmem:[#allocation2 + $0x1f8] sm:$0xff] %v1170
        %v1255 = vld [vmem:[#allocation3 + $0x8] sm:$0xff]
        %v1256 = vld [vmem:[#allocation3 + $0x10] sm:$0xff]
        %v1257 = vld [vmem:[#allocation3 + $0x18] sm:$0xff]
        %1261 = vrot.lane.b32.xlu0 %v1255, 127
        %v1262 = vpop.permute.xlu0 %1261
        %1263 = vrot.lane.b32.xlu0 %v1256, 127
        %v1264 = vpop.permute.xlu0 %1263
        %1265 = vrot.lane.b32.xlu0 %v1257, 127
        %v1266 = vpop.permute.xlu0 %1265
        %v1267 = vsel %vm389, %v1262, %v1264
        %v1268 = vsel %vm389, %v1264, %v1266
        %v1271 = vsel %vm273, %v1267, 0.0
        %v1272 = vsel %vm274, %v1268, 0.0
        %1273 = vst [vmem:[#allocation2 + $0x200] sm:$0xff] %v1271
        %1274 = vst [vmem:[#allocation2 + $0x208] sm:$0xff] %v1272
        %v1275 = vld [vmem:[#allocation3 + $0x8] sm:$0xff]
        %v1276 = vld [vmem:[#allocation3 + $0x10] sm:$0xff]
        %v1277 = vld [vmem:[#allocation3 + $0x18] sm:$0xff]
        %1281 = vrot.lane.b32.xlu0 %v1275, 113
        %v1282 = vpop.permute.xlu0 %1281
        %1283 = vrot.lane.b32.xlu0 %v1276, 113
        %v1284 = vpop.permute.xlu0 %1283
        %1285 = vrot.lane.b32.xlu0 %v1277, 113
        %v1286 = vpop.permute.xlu0 %1285
        %v1287 = vsel %vm410, %v1282, %v1284
        %v1288 = vsel %vm410, %v1284, %v1286
        %v1291 = vsel %vm283, %v1287, 0.0
        %v1292 = vsel %vm284, %v1288, 0.0
        %1293 = vst [vmem:[#allocation2 + $0x210] sm:$0xff] %v1291
        %1294 = vst [vmem:[#allocation2 + $0x218] sm:$0xff] %v1292
        %v1295 = vld [vmem:[#allocation3 + $0x8] sm:$0xff]
        %v1296 = vld [vmem:[#allocation3 + $0x10] sm:$0xff]
        %v1297 = vld [vmem:[#allocation3 + $0x18] sm:$0xff]
        %1301 = vrot.lane.b32.xlu0 %v1295, 112
        %v1302 = vpop.permute.xlu0 %1301
        %1303 = vrot.lane.b32.xlu0 %v1296, 112
        %v1304 = vpop.permute.xlu0 %1303
        %1305 = vrot.lane.b32.xlu0 %v1297, 112
        %v1306 = vpop.permute.xlu0 %1305
        %v1307 = vsel %vm431, %v1302, %v1304
        %v1308 = vsel %vm431, %v1304, %v1306
        %v1311 = vsel %vm277, %v1307, 0.0
        %v1312 = vsel %vm278, %v1308, 0.0
        %1313 = vst [vmem:[#allocation2 + $0x220] sm:$0xff] %v1311
        %1314 = vst [vmem:[#allocation2 + $0x228] sm:$0xff] %v1312
        %v1315 = vld [vmem:[#allocation3 + $0x8] sm:$0xff]
        %v1316 = vld [vmem:[#allocation3 + $0x10] sm:$0xff]
        %v1317 = vld [vmem:[#allocation3 + $0x18] sm:$0xff]
        %1321 = vrot.lane.b32.xlu0 %v1315, 111
        %v1322 = vpop.permute.xlu0 %1321
        %1323 = vrot.lane.b32.xlu0 %v1316, 111
        %v1324 = vpop.permute.xlu0 %1323
        %1325 = vrot.lane.b32.xlu0 %v1317, 111
        %v1326 = vpop.permute.xlu0 %1325
        %v1327 = vsel %vm452, %v1322, %v1324
        %v1328 = vsel %vm452, %v1324, %v1326
        %v1331 = vsel %vm285, %v1327, 0.0
        %v1332 = vsel %vm286, %v1328, 0.0
        %1333 = vst [vmem:[#allocation2 + $0x230] sm:$0xff] %v1331
        %1334 = vst [vmem:[#allocation2 + $0x238] sm:$0xff] %v1332
        %v1335 = vld [vmem:[#allocation7 + $0x18] sm:$0xff]
        %v1336 = vld [vmem:[#allocation7 + $0x20] sm:$0xff]
        %v1337 = vld [vmem:[#allocation7 + $0x28] sm:$0xff]
        %v1338 = vld [vmem:[#allocation2] sm:$0xff]
        %v1339 = vld [vmem:[#allocation2 + $0x8] sm:$0xff]
        %v1340 = vld [vmem:[#allocation2 + $0x10] sm:$0xff]
        %v1341 = vld [vmem:[#allocation2 + $0x18] sm:$0xff]
        %v1342 = vld [vmem:[#allocation2 + $0x20] sm:$0xff]
        %v1343 = vld [vmem:[#allocation2 + $0x28] sm:$0xff]
        %v1344 = vld [vmem:[#allocation2 + $0x30] sm:$0xff]
        %v1345 = vld [vmem:[#allocation2 + $0x38] sm:$0xff]
        %v1346 = vld [vmem:[#allocation2 + $0x40] sm:$0xff]
        %v1347 = vld [vmem:[#allocation2 + $0x48] sm:$0xff]
        %v1348 = vld [vmem:[#allocation2 + $0x50] sm:$0xff]
        %v1349 = vld [vmem:[#allocation2 + $0x58] sm:$0xff]
        %v1350 = vld [vmem:[#allocation2 + $0x60] sm:$0xff]
        %v1351 = vld [vmem:[#allocation2 + $0x68] sm:$0xff]
        %v1352 = vld [vmem:[#allocation2 + $0x70] sm:$0xff]
        %v1353 = vld [vmem:[#allocation2 + $0x78] sm:$0xff]
        %v1354 = vld [vmem:[#allocation2 + $0x80] sm:$0xff]
        %v1355 = vld [vmem:[#allocation2 + $0x88] sm:$0xff]
        %v1356 = vld [vmem:[#allocation2 + $0x90] sm:$0xff]
        %v1357 = vld [vmem:[#allocation2 + $0x98] sm:$0xff]
        %v1358 = vld [vmem:[#allocation2 + $0xa0] sm:$0xff]
        %v1359 = vld [vmem:[#allocation2 + $0xa8] sm:$0xff]
        %v1360 = vld [vmem:[#allocation2 + $0xb0] sm:$0xff]
        %v1361 = vld [vmem:[#allocation2 + $0xb8] sm:$0xff]
        %v1362 = vld [vmem:[#allocation2 + $0xc0] sm:$0xff]
        %v1363 = vld [vmem:[#allocation2 + $0xc8] sm:$0xff]
        %v1364 = vld [vmem:[#allocation2 + $0xd0] sm:$0xff]
        %v1365 = vld [vmem:[#allocation2 + $0xd8] sm:$0xff]
        %v1366 = vld [vmem:[#allocation2 + $0xe0] sm:$0xff]
        %v1367 = vld [vmem:[#allocation2 + $0xe8] sm:$0xff]
        %v1368 = vld [vmem:[#allocation2 + $0xf0] sm:$0xff]
        %v1369 = vld [vmem:[#allocation2 + $0xf8] sm:$0xff]
        %v1370 = vld [vmem:[#allocation2 + $0x100] sm:$0xff]
        %v1371 = vld [vmem:[#allocation2 + $0x108] sm:$0xff]
        %v1372 = vld [vmem:[#allocation2 + $0x110] sm:$0xff]
        %v1373 = vld [vmem:[#allocation2 + $0x118] sm:$0xff]
        %v1374 = vld [vmem:[#allocation2 + $0x120] sm:$0xff]
        %v1375 = vld [vmem:[#allocation2 + $0x128] sm:$0xff]
        %v1376 = vld [vmem:[#allocation2 + $0x130] sm:$0xff]
        %v1377 = vld [vmem:[#allocation2 + $0x138] sm:$0xff]
        %v1378 = vld [vmem:[#allocation2 + $0x140] sm:$0xff]
        %v1379 = vld [vmem:[#allocation2 + $0x148] sm:$0xff]
        %v1380 = vld [vmem:[#allocation2 + $0x150] sm:$0xff]
        %v1381 = vld [vmem:[#allocation2 + $0x158] sm:$0xff]
        %v1382 = vld [vmem:[#allocation2 + $0x160] sm:$0xff]
        %v1383 = vld [vmem:[#allocation2 + $0x168] sm:$0xff]
        %v1384 = vld [vmem:[#allocation2 + $0x170] sm:$0xff]
        %v1385 = vld [vmem:[#allocation2 + $0x178] sm:$0xff]
        %v1386 = vld [vmem:[#allocation2 + $0x180] sm:$0xff]
        %v1387 = vld [vmem:[#allocation2 + $0x188] sm:$0xff]
        %v1388 = vld [vmem:[#allocation2 + $0x190] sm:$0xff]
        %v1389 = vld [vmem:[#allocation2 + $0x198] sm:$0xff]
        %v1390 = vld [vmem:[#allocation2 + $0x1a0] sm:$0xff]
        %v1391 = vld [vmem:[#allocation2 + $0x1a8] sm:$0xff]
        %v1392 = vld [vmem:[#allocation2 + $0x1b0] sm:$0xff]
        %v1393 = vld [vmem:[#allocation2 + $0x1b8] sm:$0xff]
        %v1394 = vld [vmem:[#allocation2 + $0x1c0] sm:$0xff]
        %v1395 = vld [vmem:[#allocation2 + $0x1c8] sm:$0xff]
        %v1396 = vld [vmem:[#allocation2 + $0x1d0] sm:$0xff]
        %v1397 = vld [vmem:[#allocation2 + $0x1d8] sm:$0xff]
        %v1398 = vld [vmem:[#allocation2 + $0x1e0] sm:$0xff]
        %v1399 = vld [vmem:[#allocation2 + $0x1e8] sm:$0xff]
        %v1400 = vld [vmem:[#allocation2 + $0x1f0] sm:$0xff]
        %v1401 = vld [vmem:[#allocation2 + $0x1f8] sm:$0xff]
        %v1402 = vld [vmem:[#allocation2 + $0x200] sm:$0xff]
        %v1403 = vld [vmem:[#allocation2 + $0x208] sm:$0xff]
        %v1404 = vld [vmem:[#allocation2 + $0x210] sm:$0xff]
        %v1405 = vld [vmem:[#allocation2 + $0x218] sm:$0xff]
        %v1406 = vld [vmem:[#allocation2 + $0x220] sm:$0xff]
        %v1407 = vld [vmem:[#allocation2 + $0x228] sm:$0xff]
        %v1408 = vld [vmem:[#allocation2 + $0x230] sm:$0xff]
        %v1409 = vld [vmem:[#allocation2 + $0x238] sm:$0xff]
        %v1410 = vld [vmem:[#allocation9] sm:$0xff]
        %1412 = vset.pattern.permute.xlu0 3
        %1413 = vperm.xlu0 %1412, %v1410
        %v1414 = vpop.permute.xlu0 %1413
        %1419 = vrot.lane.b32.xlu0 %v1335, 80
        %v1420 = vpop.permute.xlu0 %1419
        %1421 = vrot.lane.b32.xlu0 %v1336, 80
        %v1422 = vpop.permute.xlu0 %1421
        %1423 = vrot.lane.b32.xlu0 %v1337, 80
        %v1424 = vpop.permute.xlu0 %1423
        %vm1425 = vcmask 654336
        %v1426 = vsel %vm1425, %v1420, %v1422
        %v1427 = vsel %vm1425, %v1422, %v1424
        %vm1430 = vcmask 261120
        %v1431 = vsel %vm1430, %v1424, 0
        %1433 = vmatprep.subr.mxu0 %v1339
        %1434 = vmatpush1.msra.mxu0 %v1338
        %1435 = vmatprep.subr.mxu0 %v1341
        %1436 = vmatpush1.msra.mxu0 %v1340
        %1437 = vmatprep.subr.mxu0 %v1343
        %1438 = vmatpush1.msra.mxu0 %v1342
        %1439 = vmatprep.subr.mxu0 %v1345
        %1440 = vmatpush1.msra.mxu0 %v1344
        %1441 = vmatprep.subr.mxu0 %v1347
        %1442 = vmatpush1.msra.mxu0 %v1346
        %1443 = vmatprep.subr.mxu0 %v1349
        %1444 = vmatpush1.msra.mxu0 %v1348
        %1445 = vmatprep.subr.mxu0 %v1351
        %1446 = vmatpush1.msra.mxu0 %v1350
        %1447 = vmatprep.subr.mxu0 %v1353
        %1448 = vmatpush1.msra.mxu0 %v1352
        %1449 = vmatprep.subr.mxu0 %v1355
        %1450 = vmatpush1.msra.mxu0 %v1354
        %1451 = vmatprep.subr.mxu0 %v1357
        %1452 = vmatpush1.msra.mxu0 %v1356
        %1453 = vmatprep.subr.mxu0 %v1359
        %1454 = vmatpush1.msra.mxu0 %v1358
        %1455 = vmatprep.subr.mxu0 %v1361
        %1456 = vmatpush1.msra.mxu0 %v1360
        %1457 = vmatprep.subr.mxu0 %v1363
        %1458 = vmatpush1.msra.mxu0 %v1362
        %1459 = vmatprep.subr.mxu0 %v1365
        %1460 = vmatpush1.msra.mxu0 %v1364
        %1461 = vmatprep.subr.mxu0 %v1367
        %1462 = vmatpush1.msra.mxu0 %v1366
        %1463 = vmatprep.subr.mxu0 %v1369
        %1464 = vmatpush1.msra.mxu0 %v1368
        %1465 = vmatprep.subr.mxu0 %v1371
        %1466 = vmatpush1.msra.mxu0 %v1370
        %1467 = vmatprep.subr.mxu0 %v1373
        %1468 = vmatpush1.msra.mxu0 %v1372
        %1469 = vmatprep.subr.mxu0 %v1375
        %1470 = vmatpush1.msra.mxu0 %v1374
        %1471 = vmatprep.subr.mxu0 %v1377
        %1472 = vmatpush1.msra.mxu0 %v1376
        %1473 = vmatprep.subr.mxu0 %v1379
        %1474 = vmatpush1.msra.mxu0 %v1378
        %1475 = vmatprep.subr.mxu0 %v1381
        %1476 = vmatpush1.msra.mxu0 %v1380
        %1477 = vmatprep.subr.mxu0 %v1383
        %1478 = vmatpush1.msra.mxu0 %v1382
        %1479 = vmatprep.subr.mxu0 %v1385
        %1480 = vmatpush1.msra.mxu0 %v1384
        %1481 = vmatprep.subr.mxu0 %v1387
        %1482 = vmatpush1.msra.mxu0 %v1386
        %1483 = vmatprep.subr.mxu0 %v1389
        %1484 = vmatpush1.msra.mxu0 %v1388
        %1485 = vmatprep.subr.mxu0 %v1391
        %1486 = vmatpush1.msra.mxu0 %v1390
        %1487 = vmatprep.subr.mxu0 %v1393
        %1488 = vmatpush1.msra.mxu0 %v1392
        %1489 = vmatprep.subr.mxu0 %v1395
        %1490 = vmatpush1.msra.mxu0 %v1394
        %1491 = vmatprep.subr.mxu0 %v1397
        %1492 = vmatpush1.msra.mxu0 %v1396
        %1493 = vmatprep.subr.mxu0 %v1399
        %1494 = vmatpush1.msra.mxu0 %v1398
        %1495 = vmatprep.subr.mxu0 %v1401
        %1496 = vmatpush1.msra.mxu0 %v1400
        %1497 = vmatprep.mubr.f32.mxu0 %v1427
        %1498 = vmatmul.mubr.f32.gmra.mrb[0].mxu0 %v1426
        %v1499 = vpop.f32.mrb[0].mxu0
        %v1500 = vadd.f32 %v1414, %v1499
        %v1501 = vpop.f32.mrb[0].mxu0
        %v1502 = vadd.f32 %v1414, %v1501
        %1503 = vdwg.mxu0
        %1504 = vmatprep.subr.mxu0 %v1403
        %1505 = vmatpush1.msra.mxu0 %v1402
        %1506 = vmatprep.subr.mxu0 %v1405
        %1507 = vmatpush1.msra.mxu0 %v1404
        %1508 = vmatprep.subr.mxu0 %v1407
        %1509 = vmatpush1.msra.mxu0 %v1406
        %1510 = vmatprep.subr.mxu0 %v1409
        %1511 = vmatpush1.msra.mxu0 %v1408
        %1512 = vmatprep.subr.mxu0 0.0
        %1513 = vmatpush1.msra.mxu0 0.0
        %1514 = vmatprep.subr.mxu0 0.0
        %1515 = vmatpush1.msra.mxu0 0.0
        %1516 = vmatprep.subr.mxu0 0.0
        %1517 = vmatpush1.msra.mxu0 0.0
        %1518 = vmatprep.subr.mxu0 0.0
        %1519 = vmatpush1.msra.mxu0 0.0
        %1520 = vmatprep.subr.mxu0 0.0
        %1521 = vmatpush1.msra.mxu0 0.0
        %1522 = vmatprep.subr.mxu0 0.0
        %1523 = vmatpush1.msra.mxu0 0.0
        %1524 = vmatprep.subr.mxu0 0.0
        %1525 = vmatpush1.msra.mxu0 0.0
        %1526 = vmatprep.subr.mxu0 0.0
        %1527 = vmatpush1.msra.mxu0 0.0
        %1528 = vmatprep.subr.mxu0 0.0
        %1529 = vmatpush1.msra.mxu0 0.0
        %1530 = vmatprep.subr.mxu0 0.0
        %1531 = vmatpush1.msra.mxu0 0.0
        %1532 = vmatprep.subr.mxu0 0.0
        %1533 = vmatpush1.msra.mxu0 0.0
        %1534 = vmatprep.subr.mxu0 0.0
        %1535 = vmatpush1.msra.mxu0 0.0
        %1536 = vmatprep.subr.mxu0 0.0
        %1537 = vmatpush1.msra.mxu0 0.0
        %1538 = vmatprep.subr.mxu0 0.0
        %1539 = vmatpush1.msra.mxu0 0.0
        %1540 = vmatprep.subr.mxu0 0.0
        %1541 = vmatpush1.msra.mxu0 0.0
        %1542 = vmatprep.subr.mxu0 0.0
        %1543 = vmatpush1.msra.mxu0 0.0
        %1544 = vmatprep.subr.mxu0 0.0
        %1545 = vmatpush1.msra.mxu0 0.0
        %1546 = vmatprep.subr.mxu0 0.0
        %1547 = vmatpush1.msra.mxu0 0.0
        %1548 = vmatprep.subr.mxu0 0.0
        %1549 = vmatpush1.msra.mxu0 0.0
        %1550 = vmatprep.subr.mxu0 0.0
        %1551 = vmatpush1.msra.mxu0 0.0
        %1552 = vmatprep.subr.mxu0 0.0
        %1553 = vmatpush1.msra.mxu0 0.0
        %1554 = vmatprep.subr.mxu0 0.0
        %1555 = vmatpush1.msra.mxu0 0.0
        %1556 = vmatprep.subr.mxu0 0.0
        %1557 = vmatpush1.msra.mxu0 0.0
        %1558 = vmatprep.subr.mxu0 0.0
        %1559 = vmatpush1.msra.mxu0 0.0
        %1560 = vmatprep.subr.mxu0 0.0
        %1561 = vmatpush1.msra.mxu0 0.0
        %1562 = vmatprep.subr.mxu0 0.0
        %1563 = vmatpush1.msra.mxu0 0.0
        %1564 = vmatprep.subr.mxu0 0.0
        %1565 = vmatpush1.msra.mxu0 0.0
        %1566 = vmatprep.subr.mxu0 0.0
        %1567 = vmatpush1.msra.mxu0 0.0
        %1568 = vmatprep.mubr.f32.mxu0 0.0
        %1569 = vmatmul.mubr.f32.gmra.mrb[0].mxu0 %v1431
        %v1570 = vpop.f32.mrb[0].mxu0
        %v1571 = vadd.f32 %v1500, %v1570
        %v1572 = vpop.f32.mrb[0].mxu0
        %v1573 = vadd.f32 %v1502, %v1572
        %1574 = vdwg.mxu0
        %v1575 = vmax.f32 %v1571, 0.0
        %v1576 = vmax.f32 %v1573, 0.0
        %1577 = vst [vmem:[#allocation3 + $0x8] sm:$0xff] %v1575
        %1578 = vst [vmem:[#allocation3 + $0x10] sm:$0xff] %v1576
        %v1579 = vld [vmem:[#allocation3] sm:$0xff]
        %v1580 = vld [vmem:[#allocation3 + $0x8] sm:$0xff]
        %v1581 = vld [vmem:[#allocation3 + $0x10] sm:$0xff]
        %1585 = vrot.lane.b32.xlu0 %v1579, 17
        %v1586 = vpop.permute.xlu0 %1585
        %1587 = vrot.lane.b32.xlu0 %v1580, 17
        %v1588 = vpop.permute.xlu0 %1587
        %1589 = vrot.lane.b32.xlu0 %v1581, 17
        %v1590 = vpop.permute.xlu0 %1589
        %v1591 = vsel %vm303, %v1586, %v1588
        %v1592 = vsel %vm303, %v1588, %v1590
        %v1595 = vsel %vm279, %v1591, 0.0
        %v1596 = vsel %vm280, %v1592, 0.0
        %1597 = vst [vmem:[#allocation2 + $0x240] sm:$0xff] %v1595
        %1598 = vst [vmem:[#allocation2 + $0x248] sm:$0xff] %v1596
        %v1599 = vld [vmem:[#allocation3] sm:$0xff]
        %v1600 = vld [vmem:[#allocation3 + $0x8] sm:$0xff]
        %v1601 = vld [vmem:[#allocation3 + $0x10] sm:$0xff]
        %1605 = vrot.lane.b32.xlu0 %v1599, 16
        %v1606 = vpop.permute.xlu0 %1605
        %1607 = vrot.lane.b32.xlu0 %v1600, 16
        %v1608 = vpop.permute.xlu0 %1607
        %1609 = vrot.lane.b32.xlu0 %v1601, 16
        %v1610 = vpop.permute.xlu0 %1609
        %v1611 = vsel %vm324, %v1606, %v1608
        %v1612 = vsel %vm324, %v1608, %v1610
        %v1615 = vsel %vm275, %v1611, 0.0
        %v1616 = vsel %vm276, %v1612, 0.0
        %1617 = vst [vmem:[#allocation2 + $0x250] sm:$0xff] %v1615
        %1618 = vst [vmem:[#allocation2 + $0x258] sm:$0xff] %v1616
        %v1619 = vld [vmem:[#allocation3] sm:$0xff]
        %v1620 = vld [vmem:[#allocation3 + $0x8] sm:$0xff]
        %v1621 = vld [vmem:[#allocation3 + $0x10] sm:$0xff]
        %1625 = vrot.lane.b32.xlu0 %v1619, 15
        %v1626 = vpop.permute.xlu0 %1625
        %1627 = vrot.lane.b32.xlu0 %v1620, 15
        %v1628 = vpop.permute.xlu0 %1627
        %1629 = vrot.lane.b32.xlu0 %v1621, 15
        %v1630 = vpop.permute.xlu0 %1629
        %v1631 = vsel %vm345, %v1626, %v1628
        %v1632 = vsel %vm345, %v1628, %v1630
        %v1635 = vsel %vm281, %v1631, 0.0
        %v1636 = vsel %vm282, %v1632, 0.0
        %1637 = vst [vmem:[#allocation2 + $0x260] sm:$0xff] %v1635
        %1638 = vst [vmem:[#allocation2 + $0x268] sm:$0xff] %v1636
        %v1639 = vld [vmem:[#allocation3] sm:$0xff]
        %v1640 = vld [vmem:[#allocation3 + $0x8] sm:$0xff]
        %v1641 = vld [vmem:[#allocation3 + $0x10] sm:$0xff]
        %1645 = vrot.lane.b32.xlu0 %v1639, 1
        %v1646 = vpop.permute.xlu0 %1645
        %1647 = vrot.lane.b32.xlu0 %v1640, 1
        %v1648 = vpop.permute.xlu0 %1647
        %1649 = vrot.lane.b32.xlu0 %v1641, 1
        %v1650 = vpop.permute.xlu0 %1649
        %v1651 = vsel %vm366, %v1646, %v1648
        %v1652 = vsel %vm366, %v1648, %v1650
        %v1655 = vsel %vm271, %v1651, 0.0
        %v1656 = vsel %vm272, %v1652, 0.0
        %1657 = vst [vmem:[#allocation2 + $0x270] sm:$0xff] %v1655
        %1658 = vst [vmem:[#allocation2 + $0x278] sm:$0xff] %v1656
        %1659 = vst [vmem:[#allocation2 + $0x280] sm:$0xff] %v1575
        %1660 = vst [vmem:[#allocation2 + $0x288] sm:$0xff] %v1576
        %v1661 = vld [vmem:[#allocation3 + $0x8] sm:$0xff]
        %v1662 = vld [vmem:[#allocation3 + $0x10] sm:$0xff]
        %v1663 = vld [vmem:[#allocation3 + $0x18] sm:$0xff]
        %1667 = vrot.lane.b32.xlu0 %v1661, 127
        %v1668 = vpop.permute.xlu0 %1667
        %1669 = vrot.lane.b32.xlu0 %v1662, 127
        %v1670 = vpop.permute.xlu0 %1669
        %1671 = vrot.lane.b32.xlu0 %v1663, 127
        %v1672 = vpop.permute.xlu0 %1671
        %v1673 = vsel %vm389, %v1668, %v1670
        %v1674 = vsel %vm389, %v1670, %v1672
        %v1677 = vsel %vm273, %v1673, 0.0
        %v1678 = vsel %vm274, %v1674, 0.0
        %1679 = vst [vmem:[#allocation2 + $0x290] sm:$0xff] %v1677
        %1680 = vst [vmem:[#allocation2 + $0x298] sm:$0xff] %v1678
        %v1681 = vld [vmem:[#allocation3 + $0x8] sm:$0xff]
        %v1682 = vld [vmem:[#allocation3 + $0x10] sm:$0xff]
        %v1683 = vld [vmem:[#allocation3 + $0x18] sm:$0xff]
        %1687 = vrot.lane.b32.xlu0 %v1681, 113
        %v1688 = vpop.permute.xlu0 %1687
        %1689 = vrot.lane.b32.xlu0 %v1682, 113
        %v1690 = vpop.permute.xlu0 %1689
        %1691 = vrot.lane.b32.xlu0 %v1683, 113
        %v1692 = vpop.permute.xlu0 %1691
        %v1693 = vsel %vm410, %v1688, %v1690
        %v1694 = vsel %vm410, %v1690, %v1692
        %v1697 = vsel %vm283, %v1693, 0.0
        %v1698 = vsel %vm284, %v1694, 0.0
        %1699 = vst [vmem:[#allocation2 + $0x2a0] sm:$0xff] %v1697
        %1700 = vst [vmem:[#allocation2 + $0x2a8] sm:$0xff] %v1698
        %v1701 = vld [vmem:[#allocation3 + $0x8] sm:$0xff]
        %v1702 = vld [vmem:[#allocation3 + $0x10] sm:$0xff]
        %v1703 = vld [vmem:[#allocation3 + $0x18] sm:$0xff]
        %1707 = vrot.lane.b32.xlu0 %v1701, 112
        %v1708 = vpop.permute.xlu0 %1707
        %1709 = vrot.lane.b32.xlu0 %v1702, 112
        %v1710 = vpop.permute.xlu0 %1709
        %1711 = vrot.lane.b32.xlu0 %v1703, 112
        %v1712 = vpop.permute.xlu0 %1711
        %v1713 = vsel %vm431, %v1708, %v1710
        %v1714 = vsel %vm431, %v1710, %v1712
        %v1717 = vsel %vm277, %v1713, 0.0
        %v1718 = vsel %vm278, %v1714, 0.0
        %1719 = vst [vmem:[#allocation2 + $0x2b0] sm:$0xff] %v1717
        %1720 = vst [vmem:[#allocation2 + $0x2b8] sm:$0xff] %v1718
        %v1721 = vld [vmem:[#allocation3 + $0x8] sm:$0xff]
        %v1722 = vld [vmem:[#allocation3 + $0x10] sm:$0xff]
        %v1723 = vld [vmem:[#allocation3 + $0x18] sm:$0xff]
        %1727 = vrot.lane.b32.xlu0 %v1721, 111
        %v1728 = vpop.permute.xlu0 %1727
        %1729 = vrot.lane.b32.xlu0 %v1722, 111
        %v1730 = vpop.permute.xlu0 %1729
        %1731 = vrot.lane.b32.xlu0 %v1723, 111
        %v1732 = vpop.permute.xlu0 %1731
        %v1733 = vsel %vm452, %v1728, %v1730
        %v1734 = vsel %vm452, %v1730, %v1732
        %v1737 = vsel %vm285, %v1733, 0.0
        %v1738 = vsel %vm286, %v1734, 0.0
        %1739 = vst [vmem:[#allocation2 + $0x2c0] sm:$0xff] %v1737
        %1740 = vst [vmem:[#allocation2 + $0x2c8] sm:$0xff] %v1738
        %v1741 = vld [vmem:[#allocation7 + $0x28] sm:$0xff]
        %v1742 = vld [vmem:[#allocation7 + $0x30] sm:$0xff]
        %v1743 = vld [vmem:[#allocation7 + $0x38] sm:$0xff]
        %v1744 = vld [vmem:[#allocation7 + $0x40] sm:$0xff]
        %v1745 = vld [vmem:[#allocation2] sm:$0xff]
        %v1746 = vld [vmem:[#allocation2 + $0x8] sm:$0xff]
        %v1747 = vld [vmem:[#allocation2 + $0x10] sm:$0xff]
        %v1748 = vld [vmem:[#allocation2 + $0x18] sm:$0xff]
        %v1749 = vld [vmem:[#allocation2 + $0x20] sm:$0xff]
        %v1750 = vld [vmem:[#allocation2 + $0x28] sm:$0xff]
        %v1751 = vld [vmem:[#allocation2 + $0x30] sm:$0xff]
        %v1752 = vld [vmem:[#allocation2 + $0x38] sm:$0xff]
        %v1753 = vld [vmem:[#allocation2 + $0x40] sm:$0xff]
        %v1754 = vld [vmem:[#allocation2 + $0x48] sm:$0xff]
        %v1755 = vld [vmem:[#allocation2 + $0x50] sm:$0xff]
        %v1756 = vld [vmem:[#allocation2 + $0x58] sm:$0xff]
        %v1757 = vld [vmem:[#allocation2 + $0x60] sm:$0xff]
        %v1758 = vld [vmem:[#allocation2 + $0x68] sm:$0xff]
        %v1759 = vld [vmem:[#allocation2 + $0x70] sm:$0xff]
        %v1760 = vld [vmem:[#allocation2 + $0x78] sm:$0xff]
        %v1761 = vld [vmem:[#allocation2 + $0x80] sm:$0xff]
        %v1762 = vld [vmem:[#allocation2 + $0x88] sm:$0xff]
        %v1763 = vld [vmem:[#allocation2 + $0x90] sm:$0xff]
        %v1764 = vld [vmem:[#allocation2 + $0x98] sm:$0xff]
        %v1765 = vld [vmem:[#allocation2 + $0xa0] sm:$0xff]
        %v1766 = vld [vmem:[#allocation2 + $0xa8] sm:$0xff]
        %v1767 = vld [vmem:[#allocation2 + $0xb0] sm:$0xff]
        %v1768 = vld [vmem:[#allocation2 + $0xb8] sm:$0xff]
        %v1769 = vld [vmem:[#allocation2 + $0xc0] sm:$0xff]
        %v1770 = vld [vmem:[#allocation2 + $0xc8] sm:$0xff]
        %v1771 = vld [vmem:[#allocation2 + $0xd0] sm:$0xff]
        %v1772 = vld [vmem:[#allocation2 + $0xd8] sm:$0xff]
        %v1773 = vld [vmem:[#allocation2 + $0xe0] sm:$0xff]
        %v1774 = vld [vmem:[#allocation2 + $0xe8] sm:$0xff]
        %v1775 = vld [vmem:[#allocation2 + $0xf0] sm:$0xff]
        %v1776 = vld [vmem:[#allocation2 + $0xf8] sm:$0xff]
        %v1777 = vld [vmem:[#allocation2 + $0x100] sm:$0xff]
        %v1778 = vld [vmem:[#allocation2 + $0x108] sm:$0xff]
        %v1779 = vld [vmem:[#allocation2 + $0x110] sm:$0xff]
        %v1780 = vld [vmem:[#allocation2 + $0x118] sm:$0xff]
        %v1781 = vld [vmem:[#allocation2 + $0x120] sm:$0xff]
        %v1782 = vld [vmem:[#allocation2 + $0x128] sm:$0xff]
        %v1783 = vld [vmem:[#allocation2 + $0x130] sm:$0xff]
        %v1784 = vld [vmem:[#allocation2 + $0x138] sm:$0xff]
        %v1785 = vld [vmem:[#allocation2 + $0x140] sm:$0xff]
        %v1786 = vld [vmem:[#allocation2 + $0x148] sm:$0xff]
        %v1787 = vld [vmem:[#allocation2 + $0x150] sm:$0xff]
        %v1788 = vld [vmem:[#allocation2 + $0x158] sm:$0xff]
        %v1789 = vld [vmem:[#allocation2 + $0x160] sm:$0xff]
        %v1790 = vld [vmem:[#allocation2 + $0x168] sm:$0xff]
        %v1791 = vld [vmem:[#allocation2 + $0x170] sm:$0xff]
        %v1792 = vld [vmem:[#allocation2 + $0x178] sm:$0xff]
        %v1793 = vld [vmem:[#allocation2 + $0x180] sm:$0xff]
        %v1794 = vld [vmem:[#allocation2 + $0x188] sm:$0xff]
        %v1795 = vld [vmem:[#allocation2 + $0x190] sm:$0xff]
        %v1796 = vld [vmem:[#allocation2 + $0x198] sm:$0xff]
        %v1797 = vld [vmem:[#allocation2 + $0x1a0] sm:$0xff]
        %v1798 = vld [vmem:[#allocation2 + $0x1a8] sm:$0xff]
        %v1799 = vld [vmem:[#allocation2 + $0x1b0] sm:$0xff]
        %v1800 = vld [vmem:[#allocation2 + $0x1b8] sm:$0xff]
        %v1801 = vld [vmem:[#allocation2 + $0x1c0] sm:$0xff]
        %v1802 = vld [vmem:[#allocation2 + $0x1c8] sm:$0xff]
        %v1803 = vld [vmem:[#allocation2 + $0x1d0] sm:$0xff]
        %v1804 = vld [vmem:[#allocation2 + $0x1d8] sm:$0xff]
        %v1805 = vld [vmem:[#allocation2 + $0x1e0] sm:$0xff]
        %v1806 = vld [vmem:[#allocation2 + $0x1e8] sm:$0xff]
        %v1807 = vld [vmem:[#allocation2 + $0x1f0] sm:$0xff]
        %v1808 = vld [vmem:[#allocation2 + $0x1f8] sm:$0xff]
        %v1809 = vld [vmem:[#allocation2 + $0x200] sm:$0xff]
        %v1810 = vld [vmem:[#allocation2 + $0x208] sm:$0xff]
        %v1811 = vld [vmem:[#allocation2 + $0x210] sm:$0xff]
        %v1812 = vld [vmem:[#allocation2 + $0x218] sm:$0xff]
        %v1813 = vld [vmem:[#allocation2 + $0x220] sm:$0xff]
        %v1814 = vld [vmem:[#allocation2 + $0x228] sm:$0xff]
        %v1815 = vld [vmem:[#allocation2 + $0x230] sm:$0xff]
        %v1816 = vld [vmem:[#allocation2 + $0x238] sm:$0xff]
        %v1817 = vld [vmem:[#allocation2 + $0x240] sm:$0xff]
        %v1818 = vld [vmem:[#allocation2 + $0x248] sm:$0xff]
        %v1819 = vld [vmem:[#allocation2 + $0x250] sm:$0xff]
        %v1820 = vld [vmem:[#allocation2 + $0x258] sm:$0xff]
        %v1821 = vld [vmem:[#allocation2 + $0x260] sm:$0xff]
        %v1822 = vld [vmem:[#allocation2 + $0x268] sm:$0xff]
        %v1823 = vld [vmem:[#allocation2 + $0x270] sm:$0xff]
        %v1824 = vld [vmem:[#allocation2 + $0x278] sm:$0xff]
        %v1825 = vld [vmem:[#allocation2 + $0x280] sm:$0xff]
        %v1826 = vld [vmem:[#allocation2 + $0x288] sm:$0xff]
        %v1827 = vld [vmem:[#allocation2 + $0x290] sm:$0xff]
        %v1828 = vld [vmem:[#allocation2 + $0x298] sm:$0xff]
        %v1829 = vld [vmem:[#allocation2 + $0x2a0] sm:$0xff]
        %v1830 = vld [vmem:[#allocation2 + $0x2a8] sm:$0xff]
        %v1831 = vld [vmem:[#allocation2 + $0x2b0] sm:$0xff]
        %v1832 = vld [vmem:[#allocation2 + $0x2b8] sm:$0xff]
        %v1833 = vld [vmem:[#allocation2 + $0x2c0] sm:$0xff]
        %v1834 = vld [vmem:[#allocation2 + $0x2c8] sm:$0xff]
        %v1835 = vld [vmem:[#allocation9] sm:$0xff]
        %1837 = vset.pattern.permute.xlu0 4
        %1838 = vperm.xlu0 %1837, %v1835
        %v1839 = vpop.permute.xlu0 %1838
        %1845 = vrot.lane.b32.xlu0 %v1741, 48
        %v1846 = vpop.permute.xlu0 %1845
        %1847 = vrot.lane.b32.xlu0 %v1742, 48
        %v1848 = vpop.permute.xlu0 %1847
        %1849 = vrot.lane.b32.xlu0 %v1743, 48
        %v1850 = vpop.permute.xlu0 %1849
        %1851 = vrot.lane.b32.xlu0 %v1744, 48
        %v1852 = vpop.permute.xlu0 %1851
        %vm1853 = vcmask 392192
        %v1854 = vsel %vm1853, %v1846, %v1848
        %v1855 = vsel %vm1853, %v1848, %v1850
        %v1856 = vsel %vm1853, %v1850, %v1852
        %vm1859 = vcmask 850944
        %v1860 = vsel %vm1859, %v1856, 0
        %1862 = vmatprep.subr.mxu0 %v1746
        %1863 = vmatpush1.msra.mxu0 %v1745
        %1864 = vmatprep.subr.mxu0 %v1748
        %1865 = vmatpush1.msra.mxu0 %v1747
        %1866 = vmatprep.subr.mxu0 %v1750
        %1867 = vmatpush1.msra.mxu0 %v1749
        %1868 = vmatprep.subr.mxu0 %v1752
        %1869 = vmatpush1.msra.mxu0 %v1751
        %1870 = vmatprep.subr.mxu0 %v1754
        %1871 = vmatpush1.msra.mxu0 %v1753
        %1872 = vmatprep.subr.mxu0 %v1756
        %1873 = vmatpush1.msra.mxu0 %v1755
        %1874 = vmatprep.subr.mxu0 %v1758
        %1875 = vmatpush1.msra.mxu0 %v1757
        %1876 = vmatprep.subr.mxu0 %v1760
        %1877 = vmatpush1.msra.mxu0 %v1759
        %1878 = vmatprep.subr.mxu0 %v1762
        %1879 = vmatpush1.msra.mxu0 %v1761
        %1880 = vmatprep.subr.mxu0 %v1764
        %1881 = vmatpush1.msra.mxu0 %v1763
        %1882 = vmatprep.subr.mxu0 %v1766
        %1883 = vmatpush1.msra.mxu0 %v1765
        %1884 = vmatprep.subr.mxu0 %v1768
        %1885 = vmatpush1.msra.mxu0 %v1767
        %1886 = vmatprep.subr.mxu0 %v1770
        %1887 = vmatpush1.msra.mxu0 %v1769
        %1888 = vmatprep.subr.mxu0 %v1772
        %1889 = vmatpush1.msra.mxu0 %v1771
        %1890 = vmatprep.subr.mxu0 %v1774
        %1891 = vmatpush1.msra.mxu0 %v1773
        %1892 = vmatprep.subr.mxu0 %v1776
        %1893 = vmatpush1.msra.mxu0 %v1775
        %1894 = vmatprep.subr.mxu0 %v1778
        %1895 = vmatpush1.msra.mxu0 %v1777
        %1896 = vmatprep.subr.mxu0 %v1780
        %1897 = vmatpush1.msra.mxu0 %v1779
        %1898 = vmatprep.subr.mxu0 %v1782
        %1899 = vmatpush1.msra.mxu0 %v1781
        %1900 = vmatprep.subr.mxu0 %v1784
        %1901 = vmatpush1.msra.mxu0 %v1783
        %1902 = vmatprep.subr.mxu0 %v1786
        %1903 = vmatpush1.msra.mxu0 %v1785
        %1904 = vmatprep.subr.mxu0 %v1788
        %1905 = vmatpush1.msra.mxu0 %v1787
        %1906 = vmatprep.subr.mxu0 %v1790
        %1907 = vmatpush1.msra.mxu0 %v1789
        %1908 = vmatprep.subr.mxu0 %v1792
        %1909 = vmatpush1.msra.mxu0 %v1791
        %1910 = vmatprep.subr.mxu0 %v1794
        %1911 = vmatpush1.msra.mxu0 %v1793
        %1912 = vmatprep.subr.mxu0 %v1796
        %1913 = vmatpush1.msra.mxu0 %v1795
        %1914 = vmatprep.subr.mxu0 %v1798
        %1915 = vmatpush1.msra.mxu0 %v1797
        %1916 = vmatprep.subr.mxu0 %v1800
        %1917 = vmatpush1.msra.mxu0 %v1799
        %1918 = vmatprep.subr.mxu0 %v1802
        %1919 = vmatpush1.msra.mxu0 %v1801
        %1920 = vmatprep.subr.mxu0 %v1804
        %1921 = vmatpush1.msra.mxu0 %v1803
        %1922 = vmatprep.subr.mxu0 %v1806
        %1923 = vmatpush1.msra.mxu0 %v1805
        %1924 = vmatprep.subr.mxu0 %v1808
        %1925 = vmatpush1.msra.mxu0 %v1807
        %1926 = vmatprep.mubr.f32.mxu0 %v1855
        %1927 = vmatmul.mubr.f32.gmra.mrb[0].mxu0 %v1854
        %v1928 = vpop.f32.mrb[0].mxu0
        %v1929 = vadd.f32 %v1839, %v1928
        %v1930 = vpop.f32.mrb[0].mxu0
        %v1931 = vadd.f32 %v1839, %v1930
        %1932 = vdwg.mxu0
        %1933 = vmatprep.subr.mxu0 %v1810
        %1934 = vmatpush1.msra.mxu0 %v1809
        %1935 = vmatprep.subr.mxu0 %v1812
        %1936 = vmatpush1.msra.mxu0 %v1811
        %1937 = vmatprep.subr.mxu0 %v1814
        %1938 = vmatpush1.msra.mxu0 %v1813
        %1939 = vmatprep.subr.mxu0 %v1816
        %1940 = vmatpush1.msra.mxu0 %v1815
        %1941 = vmatprep.subr.mxu0 %v1818
        %1942 = vmatpush1.msra.mxu0 %v1817
        %1943 = vmatprep.subr.mxu0 %v1820
        %1944 = vmatpush1.msra.mxu0 %v1819
        %1945 = vmatprep.subr.mxu0 %v1822
        %1946 = vmatpush1.msra.mxu0 %v1821
        %1947 = vmatprep.subr.mxu0 %v1824
        %1948 = vmatpush1.msra.mxu0 %v1823
        %1949 = vmatprep.subr.mxu0 %v1826
        %1950 = vmatpush1.msra.mxu0 %v1825
        %1951 = vmatprep.subr.mxu0 %v1828
        %1952 = vmatpush1.msra.mxu0 %v1827
        %1953 = vmatprep.subr.mxu0 %v1830
        %1954 = vmatpush1.msra.mxu0 %v1829
        %1955 = vmatprep.subr.mxu0 %v1832
        %1956 = vmatpush1.msra.mxu0 %v1831
        %1957 = vmatprep.subr.mxu0 %v1834
        %1958 = vmatpush1.msra.mxu0 %v1833
        %1959 = vmatprep.subr.mxu0 0.0
        %1960 = vmatpush1.msra.mxu0 0.0
        %1961 = vmatprep.subr.mxu0 0.0
        %1962 = vmatpush1.msra.mxu0 0.0
        %1963 = vmatprep.subr.mxu0 0.0
        %1964 = vmatpush1.msra.mxu0 0.0
        %1965 = vmatprep.subr.mxu0 0.0
        %1966 = vmatpush1.msra.mxu0 0.0
        %1967 = vmatprep.subr.mxu0 0.0
        %1968 = vmatpush1.msra.mxu0 0.0
        %1969 = vmatprep.subr.mxu0 0.0
        %1970 = vmatpush1.msra.mxu0 0.0
        %1971 = vmatprep.subr.mxu0 0.0
        %1972 = vmatpush1.msra.mxu0 0.0
        %1973 = vmatprep.subr.mxu0 0.0
        %1974 = vmatpush1.msra.mxu0 0.0
        %1975 = vmatprep.subr.mxu0 0.0
        %1976 = vmatpush1.msra.mxu0 0.0
        %1977 = vmatprep.subr.mxu0 0.0
        %1978 = vmatpush1.msra.mxu0 0.0
        %1979 = vmatprep.subr.mxu0 0.0
        %1980 = vmatpush1.msra.mxu0 0.0
        %1981 = vmatprep.subr.mxu0 0.0
        %1982 = vmatpush1.msra.mxu0 0.0
        %1983 = vmatprep.subr.mxu0 0.0
        %1984 = vmatpush1.msra.mxu0 0.0
        %1985 = vmatprep.subr.mxu0 0.0
        %1986 = vmatpush1.msra.mxu0 0.0
        %1987 = vmatprep.subr.mxu0 0.0
        %1988 = vmatpush1.msra.mxu0 0.0
        %1989 = vmatprep.subr.mxu0 0.0
        %1990 = vmatpush1.msra.mxu0 0.0
        %1991 = vmatprep.subr.mxu0 0.0
        %1992 = vmatpush1.msra.mxu0 0.0
        %1993 = vmatprep.subr.mxu0 0.0
        %1994 = vmatpush1.msra.mxu0 0.0
        %1995 = vmatprep.subr.mxu0 0.0
        %1996 = vmatpush1.msra.mxu0 0.0
        %1997 = vmatprep.mubr.f32.mxu0 0.0
        %1998 = vmatmul.mubr.f32.gmra.mrb[0].mxu0 %v1860
        %v1999 = vpop.f32.mrb[0].mxu0
        %v2000 = vadd.f32 %v1929, %v1999
        %v2001 = vpop.f32.mrb[0].mxu0
        %v2002 = vadd.f32 %v1931, %v2001
        %2003 = vdwg.mxu0
        %v2004 = vmul.f32 %v2000, 0.2
        %v2005 = vmul.f32 %v2002, 0.2
        %v2006 = vadd.f32 %v2004, %v287
        %v2007 = vadd.f32 %v2005, %v288
        %2008 = vst [vmem:[%s211] sm:$0xff] %v2006
        %2009 = vst [vmem:[%s211 + $0x8] sm:$0xff] %v2007
        %s2010 = sand.u32 %s97, 1
        %s2011 = scalar_lea.sflag [#allocation6], %s2010
        %s2012 = sand.u32 %s97, 1
        %s2013 = smul.addr %s2012, 16
        %s2014 = scalar_lea.vmem [#allocation10], %s2013
        // Predicated region
        $region49: #{tpu_custom_call.1} parent=31 // pred_check
          %p2015 = pneg %p107
        $region50: #{tpu_custom_call.1} parent=31 // pred_check_branch
          %2017 = sbr.rel (%p2015) target = $region52
        $region51: #{tpu_custom_call.1} parent=31 // pred_region
          %s2018 = smul.u32 2, %s21
          %s2020 = ssub.s32 256, 256
          %2021 = vsyncadd %s2011, %s2020
          %s2022 = smul.addr %s2018, 128
          %s2023 = scalar_lea.hbm %s3, %s2022
          %s2025 = sshll.u32 %s2014, 4
          %s2026 = int_to_ptr.vmem [resolvable:$true] %s2025
          %2028 = dma.vmem_to_hbm [thread:$0]  %s2026, 256, %s2023, %s2011
        $region52: #{tpu_custom_call.1} parent=31 // pred_fallthru
          _
      $region32: #{tpu_custom_call.1} parent=5 // pred_fallthru
        _
      %p2029 = scmp.le.s32.totalorder 2, %s16
      // Predicated region
      $region53: #{tpu_custom_call.1} parent=5 // pred_check
        %p2030 = pneg %p2029
      $region54: #{tpu_custom_call.1} parent=5 // pred_check_branch
        %2032 = sbr.rel (%p2030) target = $region56
      $region55: #{tpu_custom_call.1} parent=5 // pred_region
        %s2033 = ssub.s32 %s16, 2
        // Predicated region
        $region57: #{tpu_custom_call.1} parent=55 // pred_check
          %p2034 = pneg %p113
        $region58: #{tpu_custom_call.1} parent=55 // pred_check_branch
          %2036 = sbr.rel (%p2034) target = $region60
        $region59: #{tpu_custom_call.1} parent=55 // pred_region
          %s2037 = sand.u32 %s98, 1
          %s2038 = scalar_lea.sflag [#allocation6], %s2037
          %s2039 = sand.u32 %s98, 1
          %s2040 = smul.addr %s2039, 16
          %s2041 = scalar_lea.vmem [#allocation10], %s2040
          %2042 = dma.done %s2038, 256
        $region60: #{tpu_custom_call.1} parent=55 // pred_fallthru
          _
      $region56: #{tpu_custom_call.1} parent=5 // pred_fallthru
        _
    $region6: #{tpu_custom_call.1} parent=1 // loop_footer
      %s20 = sadd.s32 1, %s16
    $region7: #{tpu_custom_call.1} parent=1 // loop_footer_branch
      %15 = sbr.rel target = $region3
    $region8: #{tpu_custom_call.1} parent=1 // loop_exit
      _
    %2043 = vsyncpa [#allocation5], 1
    %s2044 = scalar_lea.sflag [#allocation5], 1
    %2045 = vsyncpa %s2044, 1
    %2046 = vsyncpa [#allocation8], 1
    %2047 = vsyncpa [#allocation6], 1
    %s2048 = scalar_lea.sflag [#allocation6], 1
    %2049 = vsyncpa %s2048, 1

</llo_original>
